<compile_context>
chip_gen: v5e
topology: v5e:2x2
jax: 0.10.0
libtpu: 0.0.40
codegen_flags: <defaults>
</compile_context>

<pallas_src>
import jax
import jax.numpy as jnp
import numpy as np
from jax.experimental import pallas as pl
from jax.experimental.pallas import tpu as pltpu


def crf_llh_kernel(em_ref, mask_ref, start_ref, end_ref, trans_ref,
                   tags_s_ref, mask_s_ref, emgold_s_ref, start_s_ref,
                   end_s_ref, trans_s_ref, out_ref):
    B, S, T = em_ref.shape

    # ---------------- scalar path: gold-path numerator (SMEM, scalar unit) ----------------
    # num_b = start[tags[b,0]] + em[b,0,tags[b,0]]
    #       + sum_{i>=1} mask[b,i] * (trans[tags[b,i-1],tags[b,i]] + em[b,i,tags[b,i]])
    #       + end[tags[b, len_b - 1]]
    # Gold-path emissions arrive pre-gathered as a flat (B*S,) SMEM vector.
    num_total = jnp.float32(0.0)
    total_len = jnp.int32(0)
    for b in range(B):
        base = b * S
        t0 = tags_s_ref[base]
        nb = start_s_ref[t0] + emgold_s_ref[base]
        length = jnp.int32(1)
        for i in range(1, S):
            m_i = mask_s_ref[base + i]                 # int32 {0,1}
            tp = tags_s_ref[base + i - 1]
            tc = tags_s_ref[base + i]
            contrib = trans_s_ref[tp * T + tc] + emgold_s_ref[base + i]
            nb = nb + jnp.where(m_i > 0, contrib, jnp.float32(0.0))
            length = length + m_i
        last_tag = tags_s_ref[base + length - 1]       # left-aligned mask assumed
        nb = nb + end_s_ref[last_tag]
        num_total = num_total + nb
        total_len = total_len + length
    mask_total = total_len.astype(jnp.float32)         # sum(mask) — no XLU reductions needed

    # ---------------- vector path: forward-algorithm denominator ----------------
    trans = trans_ref[...]                             # (T, T)  [prev j, next k]
    # Hoisted, column-max-shifted exp(transitions): et_jk[j, k] = exp(trans[j,k] - cmax[k])
    cmax = jnp.max(trans, axis=0, keepdims=True)       # (1, T) over j
    et_jk = jnp.exp(trans - cmax)                      # (T, T), no transpose

    tiny = jnp.float32(1e-30)                          # guards log(0) for forbidden transitions
    den = start_ref[...] + em_ref[:, 0, :]             # (B, T)
    for i in range(1, S):                              # S small & static: fully unrolled
        em_i = em_ref[:, i, :]                         # (B, T)   per-step vld from VMEM
        m_col = mask_ref[:, i:i + 1]                   # (B, 1)
        m_b = jnp.max(den, axis=-1, keepdims=True)     # (B, 1)
        p = jnp.exp(den - m_b)                         # (B, T)   B*T exps (EUP)
        # z[b, k] = sum_j p[b, j] * exp(trans[j, k] - cmax[k])  — one small MXU dot
        z = jnp.dot(p, et_jk, preferred_element_type=jnp.float32)    # (B, T)
        z = jnp.maximum(z, tiny)
        nxt = em_i + m_b + cmax + jnp.log(z)           # (B, T)   B*T logs (EUP)
        den = jnp.where(m_col > 0.0, nxt, den)

    fin = den + end_ref[...]                           # (B, T)
    mfin = jnp.max(fin, axis=-1, keepdims=True)
    den_b = mfin + jnp.log(jnp.sum(jnp.exp(fin - mfin), axis=-1, keepdims=True))  # (B, 1)
    den_sum = jnp.sum(den_b, axis=0, keepdims=True)    # (1, 1)

    out_ref[...] = (num_total - den_sum) / mask_total  # mean llh over mask tokens


@jax.jit
def crf_forward(emissions, tags, mask, start_transitions, end_transitions, transitions):
    """emissions: (B, S, T), tags: (B, S) int, mask: (B, S) {0,1} (left-aligned)."""
    B, S, T = emissions.shape

    # vector-path inputs (VMEM) — no transposes, only casts
    em = emissions.astype(jnp.float32)                 # (B, S, T)
    mask_f = mask.astype(jnp.float32)                  # (B, S)
    start_2d = start_transitions.reshape(1, T).astype(jnp.float32)
    end_2d = end_transitions.reshape(1, T).astype(jnp.float32)
    trans_2d = transitions.astype(jnp.float32)         # (T, T)

    # scalar-path inputs (SMEM, flat 1-D to avoid 2-D SMEM padding)
    tags_i = tags.astype(jnp.int32)
    tags_flat = tags_i.reshape(B * S)
    mask_flat = mask.reshape(B * S).astype(jnp.int32)
    # gold-path emission gather done once here: only (B*S,) goes to SMEM
    em_gold = jnp.take_along_axis(em, tags_i[..., None], axis=-1)[..., 0].reshape(B * S)
    start_1d = start_transitions.reshape(T).astype(jnp.float32)
    end_1d = end_transitions.reshape(T).astype(jnp.float32)
    trans_flat = transitions.reshape(T * T).astype(jnp.float32)

    vmem = pl.BlockSpec(memory_space=pltpu.MemorySpace.VMEM)
    smem = pl.BlockSpec(memory_space=pltpu.MemorySpace.SMEM)

    out = pl.pallas_call(
        crf_llh_kernel,
        out_shape=jax.ShapeDtypeStruct((1, 1), jnp.float32),
        in_specs=[vmem, vmem, vmem, vmem, vmem,         # em, mask, start, end, trans
                  smem, smem, smem, smem, smem, smem],  # tags, mask, em_gold, start, end, trans (flat)
        out_specs=vmem,
    )(em, mask_f, start_2d, end_2d, trans_2d,
      tags_flat, mask_flat, em_gold, start_1d, end_1d, trans_flat)
    return out[0, 0]


def crf_forward_ref(emissions, tags, mask, start, end, trans):
    """Pure-JAX reference mirroring the PyTorch CRF.forward exactly."""
    em = jnp.transpose(emissions, (1, 0, 2))
    tg = jnp.transpose(tags, (1, 0))
    mk = jnp.transpose(mask, (1, 0)).astype(emissions.dtype)
    S, B, T = em.shape
    ar = jnp.arange(B)
    score = start[tg[0]] + em[0, ar, tg[0]]
    for i in range(1, S):
        score = score + trans[tg[i - 1], tg[i]] * mk[i]
        score = score + em[i, ar, tg[i]] * mk[i]
    seq_ends = mk.sum(axis=0).astype(jnp.int32) - 1
    last_tags = tg[seq_ends, ar]
    score = score + end[last_tags]

    nscore = start + em[0]
    for i in range(1, S):
        nxt = jax.nn.logsumexp(nscore[:, :, None] + trans[None, :, :] + em[i][:, None, :], axis=1)
        nscore = jnp.where(mk[i][:, None] > 0, nxt, nscore)
    denom = jax.nn.logsumexp(nscore + end, axis=1)
    llh = score - denom
    return llh.sum() / mk.sum()


if __name__ == "__main__":
    B, S, T = 4, 8, 16
    key = jax.random.PRNGKey(0)
    k_em, k_tag, k_start, k_end, k_trans = jax.random.split(key, 5)

    # deterministic parameter init: uniform(-0.1, 0.1), same shapes as nn.Parameter init
    start_transitions = jax.random.uniform(k_start, (T,), minval=-0.1, maxval=0.1)
    end_transitions = jax.random.uniform(k_end, (T,), minval=-0.1, maxval=0.1)
    transitions = jax.random.uniform(k_trans, (T, T), minval=-0.1, maxval=0.1)

    emissions = jax.random.normal(k_em, (B, S, T), dtype=jnp.float32)
    tags = jax.random.randint(k_tag, (B, S), 0, T, dtype=jnp.int32)
    # left-aligned mask (mask[:, 0] all ones, as asserted by the torch module)
    lengths = jnp.array([S, 6, 5, S], dtype=jnp.int32)
    mask = (jnp.arange(S)[None, :] < lengths[:, None]).astype(jnp.uint8)

    out = crf_forward(emissions, tags, mask, start_transitions, end_transitions, transitions)
    out = jax.block_until_ready(out)

    ref = crf_forward_ref(emissions, tags, mask.astype(jnp.float32),
                          start_transitions, end_transitions, transitions)
    ref = jax.block_until_ready(ref)

    np.testing.assert_allclose(np.asarray(out), np.asarray(ref), rtol=1e-3, atol=1e-3)
    print("KERNEL_OK")
</pallas_src>

<mosaic_0001>
module attributes {stable_mosaic.version = 11 : i64} {
  func.func @crf_llh_kernel(%arg0: memref<4x8x16xf32, #tpu.memory_space<vmem>>, %arg1: memref<4x8xf32, #tpu.memory_space<vmem>>, %arg2: memref<1x16xf32, #tpu.memory_space<vmem>>, %arg3: memref<1x16xf32, #tpu.memory_space<vmem>>, %arg4: memref<16x16xf32, #tpu.memory_space<vmem>>, %arg5: memref<32xi32, #tpu.memory_space<smem>>, %arg6: memref<32xi32, #tpu.memory_space<smem>>, %arg7: memref<32xf32, #tpu.memory_space<smem>>, %arg8: memref<16xf32, #tpu.memory_space<smem>>, %arg9: memref<16xf32, #tpu.memory_space<smem>>, %arg10: memref<256xf32, #tpu.memory_space<smem>>, %arg11: memref<1x1xf32, #tpu.memory_space<vmem>>) attributes {dimension_semantics = [], scalar_prefetch = 0 : i64, scratch_operands = 0 : i64, tpu.core_type = #tpu.core_type<tc>} {
    %c0 = arith.constant 0 : index
    %0 = memref.load %arg5[%c0] : memref<32xi32, #tpu.memory_space<smem>>
    %1 = arith.index_cast %0 : i32 to index
    %2 = memref.load %arg8[%1] : memref<16xf32, #tpu.memory_space<smem>>
    %c0_0 = arith.constant 0 : index
    %3 = memref.load %arg7[%c0_0] : memref<32xf32, #tpu.memory_space<smem>>
    %4 = arith.addf %2, %3 : f32
    %c1 = arith.constant 1 : index
    %5 = memref.load %arg6[%c1] : memref<32xi32, #tpu.memory_space<smem>>
    %c0_1 = arith.constant 0 : index
    %6 = memref.load %arg5[%c0_1] : memref<32xi32, #tpu.memory_space<smem>>
    %c1_2 = arith.constant 1 : index
    %7 = memref.load %arg5[%c1_2] : memref<32xi32, #tpu.memory_space<smem>>
    %c16_i32 = arith.constant 16 : i32
    %8 = arith.muli %6, %c16_i32 : i32
    %9 = arith.addi %8, %7 : i32
    %10 = arith.index_cast %9 : i32 to index
    %11 = memref.load %arg10[%10] : memref<256xf32, #tpu.memory_space<smem>>
    %c1_3 = arith.constant 1 : index
    %12 = memref.load %arg7[%c1_3] : memref<32xf32, #tpu.memory_space<smem>>
    %13 = arith.addf %11, %12 : f32
    %c0_i32 = arith.constant 0 : i32
    %14 = arith.cmpi sgt, %5, %c0_i32 : i32
    %cst = arith.constant 0.000000e+00 : f32
    %15 = arith.select %14, %13, %cst : f32
    %16 = arith.addf %4, %15 : f32
    %c1_i32 = arith.constant 1 : i32
    %17 = arith.addi %c1_i32, %5 : i32
    %c2 = arith.constant 2 : index
    %18 = memref.load %arg6[%c2] : memref<32xi32, #tpu.memory_space<smem>>
    %c1_4 = arith.constant 1 : index
    %19 = memref.load %arg5[%c1_4] : memref<32xi32, #tpu.memory_space<smem>>
    %c2_5 = arith.constant 2 : index
    %20 = memref.load %arg5[%c2_5] : memref<32xi32, #tpu.memory_space<smem>>
    %c16_i32_6 = arith.constant 16 : i32
    %21 = arith.muli %19, %c16_i32_6 : i32
    %22 = arith.addi %21, %20 : i32
    %23 = arith.index_cast %22 : i32 to index
    %24 = memref.load %arg10[%23] : memref<256xf32, #tpu.memory_space<smem>>
    %c2_7 = arith.constant 2 : index
    %25 = memref.load %arg7[%c2_7] : memref<32xf32, #tpu.memory_space<smem>>
    %26 = arith.addf %24, %25 : f32
    %c0_i32_8 = arith.constant 0 : i32
    %27 = arith.cmpi sgt, %18, %c0_i32_8 : i32
    %cst_9 = arith.constant 0.000000e+00 : f32
    %28 = arith.select %27, %26, %cst_9 : f32
    %29 = arith.addf %16, %28 : f32
    %30 = arith.addi %17, %18 : i32
    %c3 = arith.constant 3 : index
    %31 = memref.load %arg6[%c3] : memref<32xi32, #tpu.memory_space<smem>>
    %c2_10 = arith.constant 2 : index
    %32 = memref.load %arg5[%c2_10] : memref<32xi32, #tpu.memory_space<smem>>
    %c3_11 = arith.constant 3 : index
    %33 = memref.load %arg5[%c3_11] : memref<32xi32, #tpu.memory_space<smem>>
    %c16_i32_12 = arith.constant 16 : i32
    %34 = arith.muli %32, %c16_i32_12 : i32
    %35 = arith.addi %34, %33 : i32
    %36 = arith.index_cast %35 : i32 to index
    %37 = memref.load %arg10[%36] : memref<256xf32, #tpu.memory_space<smem>>
    %c3_13 = arith.constant 3 : index
    %38 = memref.load %arg7[%c3_13] : memref<32xf32, #tpu.memory_space<smem>>
    %39 = arith.addf %37, %38 : f32
    %c0_i32_14 = arith.constant 0 : i32
    %40 = arith.cmpi sgt, %31, %c0_i32_14 : i32
    %cst_15 = arith.constant 0.000000e+00 : f32
    %41 = arith.select %40, %39, %cst_15 : f32
    %42 = arith.addf %29, %41 : f32
    %43 = arith.addi %30, %31 : i32
    %c4 = arith.constant 4 : index
    %44 = memref.load %arg6[%c4] : memref<32xi32, #tpu.memory_space<smem>>
    %c3_16 = arith.constant 3 : index
    %45 = memref.load %arg5[%c3_16] : memref<32xi32, #tpu.memory_space<smem>>
    %c4_17 = arith.constant 4 : index
    %46 = memref.load %arg5[%c4_17] : memref<32xi32, #tpu.memory_space<smem>>
    %c16_i32_18 = arith.constant 16 : i32
    %47 = arith.muli %45, %c16_i32_18 : i32
    %48 = arith.addi %47, %46 : i32
    %49 = arith.index_cast %48 : i32 to index
    %50 = memref.load %arg10[%49] : memref<256xf32, #tpu.memory_space<smem>>
    %c4_19 = arith.constant 4 : index
    %51 = memref.load %arg7[%c4_19] : memref<32xf32, #tpu.memory_space<smem>>
    %52 = arith.addf %50, %51 : f32
    %c0_i32_20 = arith.constant 0 : i32
    %53 = arith.cmpi sgt, %44, %c0_i32_20 : i32
    %cst_21 = arith.constant 0.000000e+00 : f32
    %54 = arith.select %53, %52, %cst_21 : f32
    %55 = arith.addf %42, %54 : f32
    %56 = arith.addi %43, %44 : i32
    %c5 = arith.constant 5 : index
    %57 = memref.load %arg6[%c5] : memref<32xi32, #tpu.memory_space<smem>>
    %c4_22 = arith.constant 4 : index
    %58 = memref.load %arg5[%c4_22] : memref<32xi32, #tpu.memory_space<smem>>
    %c5_23 = arith.constant 5 : index
    %59 = memref.load %arg5[%c5_23] : memref<32xi32, #tpu.memory_space<smem>>
    %c16_i32_24 = arith.constant 16 : i32
    %60 = arith.muli %58, %c16_i32_24 : i32
    %61 = arith.addi %60, %59 : i32
    %62 = arith.index_cast %61 : i32 to index
    %63 = memref.load %arg10[%62] : memref<256xf32, #tpu.memory_space<smem>>
    %c5_25 = arith.constant 5 : index
    %64 = memref.load %arg7[%c5_25] : memref<32xf32, #tpu.memory_space<smem>>
    %65 = arith.addf %63, %64 : f32
    %c0_i32_26 = arith.constant 0 : i32
    %66 = arith.cmpi sgt, %57, %c0_i32_26 : i32
    %cst_27 = arith.constant 0.000000e+00 : f32
    %67 = arith.select %66, %65, %cst_27 : f32
    %68 = arith.addf %55, %67 : f32
    %69 = arith.addi %56, %57 : i32
    %c6 = arith.constant 6 : index
    %70 = memref.load %arg6[%c6] : memref<32xi32, #tpu.memory_space<smem>>
    %c5_28 = arith.constant 5 : index
    %71 = memref.load %arg5[%c5_28] : memref<32xi32, #tpu.memory_space<smem>>
    %c6_29 = arith.constant 6 : index
    %72 = memref.load %arg5[%c6_29] : memref<32xi32, #tpu.memory_space<smem>>
    %c16_i32_30 = arith.constant 16 : i32
    %73 = arith.muli %71, %c16_i32_30 : i32
    %74 = arith.addi %73, %72 : i32
    %75 = arith.index_cast %74 : i32 to index
    %76 = memref.load %arg10[%75] : memref<256xf32, #tpu.memory_space<smem>>
    %c6_31 = arith.constant 6 : index
    %77 = memref.load %arg7[%c6_31] : memref<32xf32, #tpu.memory_space<smem>>
    %78 = arith.addf %76, %77 : f32
    %c0_i32_32 = arith.constant 0 : i32
    %79 = arith.cmpi sgt, %70, %c0_i32_32 : i32
    %cst_33 = arith.constant 0.000000e+00 : f32
    %80 = arith.select %79, %78, %cst_33 : f32
    %81 = arith.addf %68, %80 : f32
    %82 = arith.addi %69, %70 : i32
    %c7 = arith.constant 7 : index
    %83 = memref.load %arg6[%c7] : memref<32xi32, #tpu.memory_space<smem>>
    %c6_34 = arith.constant 6 : index
    %84 = memref.load %arg5[%c6_34] : memref<32xi32, #tpu.memory_space<smem>>
    %c7_35 = arith.constant 7 : index
    %85 = memref.load %arg5[%c7_35] : memref<32xi32, #tpu.memory_space<smem>>
    %c16_i32_36 = arith.constant 16 : i32
    %86 = arith.muli %84, %c16_i32_36 : i32
    %87 = arith.addi %86, %85 : i32
    %88 = arith.index_cast %87 : i32 to index
    %89 = memref.load %arg10[%88] : memref<256xf32, #tpu.memory_space<smem>>
    %c7_37 = arith.constant 7 : index
    %90 = memref.load %arg7[%c7_37] : memref<32xf32, #tpu.memory_space<smem>>
    %91 = arith.addf %89, %90 : f32
    %c0_i32_38 = arith.constant 0 : i32
    %92 = arith.cmpi sgt, %83, %c0_i32_38 : i32
    %cst_39 = arith.constant 0.000000e+00 : f32
    %93 = arith.select %92, %91, %cst_39 : f32
    %94 = arith.addf %81, %93 : f32
    %95 = arith.addi %82, %83 : i32
    %c0_i32_40 = arith.constant 0 : i32
    %96 = arith.addi %c0_i32_40, %95 : i32
    %c1_i32_41 = arith.constant 1 : i32
    %97 = arith.subi %96, %c1_i32_41 : i32
    %98 = arith.index_cast %97 : i32 to index
    %99 = memref.load %arg5[%98] : memref<32xi32, #tpu.memory_space<smem>>
    %100 = arith.index_cast %99 : i32 to index
    %101 = memref.load %arg9[%100] : memref<16xf32, #tpu.memory_space<smem>>
    %102 = arith.addf %94, %101 : f32
    %cst_42 = arith.constant 0.000000e+00 : f32
    %103 = arith.addf %cst_42, %102 : f32
    %c0_i32_43 = arith.constant 0 : i32
    %104 = arith.addi %c0_i32_43, %95 : i32
    %c8 = arith.constant 8 : index
    %105 = memref.load %arg5[%c8] : memref<32xi32, #tpu.memory_space<smem>>
    %106 = arith.index_cast %105 : i32 to index
    %107 = memref.load %arg8[%106] : memref<16xf32, #tpu.memory_space<smem>>
    %c8_44 = arith.constant 8 : index
    %108 = memref.load %arg7[%c8_44] : memref<32xf32, #tpu.memory_space<smem>>
    %109 = arith.addf %107, %108 : f32
    %c9 = arith.constant 9 : index
    %110 = memref.load %arg6[%c9] : memref<32xi32, #tpu.memory_space<smem>>
    %c8_45 = arith.constant 8 : index
    %111 = memref.load %arg5[%c8_45] : memref<32xi32, #tpu.memory_space<smem>>
    %c9_46 = arith.constant 9 : index
    %112 = memref.load %arg5[%c9_46] : memref<32xi32, #tpu.memory_space<smem>>
    %c16_i32_47 = arith.constant 16 : i32
    %113 = arith.muli %111, %c16_i32_47 : i32
    %114 = arith.addi %113, %112 : i32
    %115 = arith.index_cast %114 : i32 to index
    %116 = memref.load %arg10[%115] : memref<256xf32, #tpu.memory_space<smem>>
    %c9_48 = arith.constant 9 : index
    %117 = memref.load %arg7[%c9_48] : memref<32xf32, #tpu.memory_space<smem>>
    %118 = arith.addf %116, %117 : f32
    %c0_i32_49 = arith.constant 0 : i32
    %119 = arith.cmpi sgt, %110, %c0_i32_49 : i32
    %cst_50 = arith.constant 0.000000e+00 : f32
    %120 = arith.select %119, %118, %cst_50 : f32
    %121 = arith.addf %109, %120 : f32
    %c1_i32_51 = arith.constant 1 : i32
    %122 = arith.addi %c1_i32_51, %110 : i32
    %c10 = arith.constant 10 : index
    %123 = memref.load %arg6[%c10] : memref<32xi32, #tpu.memory_space<smem>>
    %c9_52 = arith.constant 9 : index
    %124 = memref.load %arg5[%c9_52] : memref<32xi32, #tpu.memory_space<smem>>
    %c10_53 = arith.constant 10 : index
    %125 = memref.load %arg5[%c10_53] : memref<32xi32, #tpu.memory_space<smem>>
    %c16_i32_54 = arith.constant 16 : i32
    %126 = arith.muli %124, %c16_i32_54 : i32
    %127 = arith.addi %126, %125 : i32
    %128 = arith.index_cast %127 : i32 to index
    %129 = memref.load %arg10[%128] : memref<256xf32, #tpu.memory_space<smem>>
    %c10_55 = arith.constant 10 : index
    %130 = memref.load %arg7[%c10_55] : memref<32xf32, #tpu.memory_space<smem>>
    %131 = arith.addf %129, %130 : f32
    %c0_i32_56 = arith.constant 0 : i32
    %132 = arith.cmpi sgt, %123, %c0_i32_56 : i32
    %cst_57 = arith.constant 0.000000e+00 : f32
    %133 = arith.select %132, %131, %cst_57 : f32
    %134 = arith.addf %121, %133 : f32
    %135 = arith.addi %122, %123 : i32
    %c11 = arith.constant 11 : index
    %136 = memref.load %arg6[%c11] : memref<32xi32, #tpu.memory_space<smem>>
    %c10_58 = arith.constant 10 : index
    %137 = memref.load %arg5[%c10_58] : memref<32xi32, #tpu.memory_space<smem>>
    %c11_59 = arith.constant 11 : index
    %138 = memref.load %arg5[%c11_59] : memref<32xi32, #tpu.memory_space<smem>>
    %c16_i32_60 = arith.constant 16 : i32
    %139 = arith.muli %137, %c16_i32_60 : i32
    %140 = arith.addi %139, %138 : i32
    %141 = arith.index_cast %140 : i32 to index
    %142 = memref.load %arg10[%141] : memref<256xf32, #tpu.memory_space<smem>>
    %c11_61 = arith.constant 11 : index
    %143 = memref.load %arg7[%c11_61] : memref<32xf32, #tpu.memory_space<smem>>
    %144 = arith.addf %142, %143 : f32
    %c0_i32_62 = arith.constant 0 : i32
    %145 = arith.cmpi sgt, %136, %c0_i32_62 : i32
    %cst_63 = arith.constant 0.000000e+00 : f32
    %146 = arith.select %145, %144, %cst_63 : f32
    %147 = arith.addf %134, %146 : f32
    %148 = arith.addi %135, %136 : i32
    %c12 = arith.constant 12 : index
    %149 = memref.load %arg6[%c12] : memref<32xi32, #tpu.memory_space<smem>>
    %c11_64 = arith.constant 11 : index
    %150 = memref.load %arg5[%c11_64] : memref<32xi32, #tpu.memory_space<smem>>
    %c12_65 = arith.constant 12 : index
    %151 = memref.load %arg5[%c12_65] : memref<32xi32, #tpu.memory_space<smem>>
    %c16_i32_66 = arith.constant 16 : i32
    %152 = arith.muli %150, %c16_i32_66 : i32
    %153 = arith.addi %152, %151 : i32
    %154 = arith.index_cast %153 : i32 to index
    %155 = memref.load %arg10[%154] : memref<256xf32, #tpu.memory_space<smem>>
    %c12_67 = arith.constant 12 : index
    %156 = memref.load %arg7[%c12_67] : memref<32xf32, #tpu.memory_space<smem>>
    %157 = arith.addf %155, %156 : f32
    %c0_i32_68 = arith.constant 0 : i32
    %158 = arith.cmpi sgt, %149, %c0_i32_68 : i32
    %cst_69 = arith.constant 0.000000e+00 : f32
    %159 = arith.select %158, %157, %cst_69 : f32
    %160 = arith.addf %147, %159 : f32
    %161 = arith.addi %148, %149 : i32
    %c13 = arith.constant 13 : index
    %162 = memref.load %arg6[%c13] : memref<32xi32, #tpu.memory_space<smem>>
    %c12_70 = arith.constant 12 : index
    %163 = memref.load %arg5[%c12_70] : memref<32xi32, #tpu.memory_space<smem>>
    %c13_71 = arith.constant 13 : index
    %164 = memref.load %arg5[%c13_71] : memref<32xi32, #tpu.memory_space<smem>>
    %c16_i32_72 = arith.constant 16 : i32
    %165 = arith.muli %163, %c16_i32_72 : i32
    %166 = arith.addi %165, %164 : i32
    %167 = arith.index_cast %166 : i32 to index
    %168 = memref.load %arg10[%167] : memref<256xf32, #tpu.memory_space<smem>>
    %c13_73 = arith.constant 13 : index
    %169 = memref.load %arg7[%c13_73] : memref<32xf32, #tpu.memory_space<smem>>
    %170 = arith.addf %168, %169 : f32
    %c0_i32_74 = arith.constant 0 : i32
    %171 = arith.cmpi sgt, %162, %c0_i32_74 : i32
    %cst_75 = arith.constant 0.000000e+00 : f32
    %172 = arith.select %171, %170, %cst_75 : f32
    %173 = arith.addf %160, %172 : f32
    %174 = arith.addi %161, %162 : i32
    %c14 = arith.constant 14 : index
    %175 = memref.load %arg6[%c14] : memref<32xi32, #tpu.memory_space<smem>>
    %c13_76 = arith.constant 13 : index
    %176 = memref.load %arg5[%c13_76] : memref<32xi32, #tpu.memory_space<smem>>
    %c14_77 = arith.constant 14 : index
    %177 = memref.load %arg5[%c14_77] : memref<32xi32, #tpu.memory_space<smem>>
    %c16_i32_78 = arith.constant 16 : i32
    %178 = arith.muli %176, %c16_i32_78 : i32
    %179 = arith.addi %178, %177 : i32
    %180 = arith.index_cast %179 : i32 to index
    %181 = memref.load %arg10[%180] : memref<256xf32, #tpu.memory_space<smem>>
    %c14_79 = arith.constant 14 : index
    %182 = memref.load %arg7[%c14_79] : memref<32xf32, #tpu.memory_space<smem>>
    %183 = arith.addf %181, %182 : f32
    %c0_i32_80 = arith.constant 0 : i32
    %184 = arith.cmpi sgt, %175, %c0_i32_80 : i32
    %cst_81 = arith.constant 0.000000e+00 : f32
    %185 = arith.select %184, %183, %cst_81 : f32
    %186 = arith.addf %173, %185 : f32
    %187 = arith.addi %174, %175 : i32
    %c15 = arith.constant 15 : index
    %188 = memref.load %arg6[%c15] : memref<32xi32, #tpu.memory_space<smem>>
    %c14_82 = arith.constant 14 : index
    %189 = memref.load %arg5[%c14_82] : memref<32xi32, #tpu.memory_space<smem>>
    %c15_83 = arith.constant 15 : index
    %190 = memref.load %arg5[%c15_83] : memref<32xi32, #tpu.memory_space<smem>>
    %c16_i32_84 = arith.constant 16 : i32
    %191 = arith.muli %189, %c16_i32_84 : i32
    %192 = arith.addi %191, %190 : i32
    %193 = arith.index_cast %192 : i32 to index
    %194 = memref.load %arg10[%193] : memref<256xf32, #tpu.memory_space<smem>>
    %c15_85 = arith.constant 15 : index
    %195 = memref.load %arg7[%c15_85] : memref<32xf32, #tpu.memory_space<smem>>
    %196 = arith.addf %194, %195 : f32
    %c0_i32_86 = arith.constant 0 : i32
    %197 = arith.cmpi sgt, %188, %c0_i32_86 : i32
    %cst_87 = arith.constant 0.000000e+00 : f32
    %198 = arith.select %197, %196, %cst_87 : f32
    %199 = arith.addf %186, %198 : f32
    %200 = arith.addi %187, %188 : i32
    %c8_i32 = arith.constant 8 : i32
    %201 = arith.addi %c8_i32, %200 : i32
    %c1_i32_88 = arith.constant 1 : i32
    %202 = arith.subi %201, %c1_i32_88 : i32
    %203 = arith.index_cast %202 : i32 to index
    %204 = memref.load %arg5[%203] : memref<32xi32, #tpu.memory_space<smem>>
    %205 = arith.index_cast %204 : i32 to index
    %206 = memref.load %arg9[%205] : memref<16xf32, #tpu.memory_space<smem>>
    %207 = arith.addf %199, %206 : f32
    %208 = arith.addf %103, %207 : f32
    %209 = arith.addi %104, %200 : i32
    %c16 = arith.constant 16 : index
    %210 = memref.load %arg5[%c16] : memref<32xi32, #tpu.memory_space<smem>>
    %211 = arith.index_cast %210 : i32 to index
    %212 = memref.load %arg8[%211] : memref<16xf32, #tpu.memory_space<smem>>
    %c16_89 = arith.constant 16 : index
    %213 = memref.load %arg7[%c16_89] : memref<32xf32, #tpu.memory_space<smem>>
    %214 = arith.addf %212, %213 : f32
    %c17 = arith.constant 17 : index
    %215 = memref.load %arg6[%c17] : memref<32xi32, #tpu.memory_space<smem>>
    %c16_90 = arith.constant 16 : index
    %216 = memref.load %arg5[%c16_90] : memref<32xi32, #tpu.memory_space<smem>>
    %c17_91 = arith.constant 17 : index
    %217 = memref.load %arg5[%c17_91] : memref<32xi32, #tpu.memory_space<smem>>
    %c16_i32_92 = arith.constant 16 : i32
    %218 = arith.muli %216, %c16_i32_92 : i32
    %219 = arith.addi %218, %217 : i32
    %220 = arith.index_cast %219 : i32 to index
    %221 = memref.load %arg10[%220] : memref<256xf32, #tpu.memory_space<smem>>
    %c17_93 = arith.constant 17 : index
    %222 = memref.load %arg7[%c17_93] : memref<32xf32, #tpu.memory_space<smem>>
    %223 = arith.addf %221, %222 : f32
    %c0_i32_94 = arith.constant 0 : i32
    %224 = arith.cmpi sgt, %215, %c0_i32_94 : i32
    %cst_95 = arith.constant 0.000000e+00 : f32
    %225 = arith.select %224, %223, %cst_95 : f32
    %226 = arith.addf %214, %225 : f32
    %c1_i32_96 = arith.constant 1 : i32
    %227 = arith.addi %c1_i32_96, %215 : i32
    %c18 = arith.constant 18 : index
    %228 = memref.load %arg6[%c18] : memref<32xi32, #tpu.memory_space<smem>>
    %c17_97 = arith.constant 17 : index
    %229 = memref.load %arg5[%c17_97] : memref<32xi32, #tpu.memory_space<smem>>
    %c18_98 = arith.constant 18 : index
    %230 = memref.load %arg5[%c18_98] : memref<32xi32, #tpu.memory_space<smem>>
    %c16_i32_99 = arith.constant 16 : i32
    %231 = arith.muli %229, %c16_i32_99 : i32
    %232 = arith.addi %231, %230 : i32
    %233 = arith.index_cast %232 : i32 to index
    %234 = memref.load %arg10[%233] : memref<256xf32, #tpu.memory_space<smem>>
    %c18_100 = arith.constant 18 : index
    %235 = memref.load %arg7[%c18_100] : memref<32xf32, #tpu.memory_space<smem>>
    %236 = arith.addf %234, %235 : f32
    %c0_i32_101 = arith.constant 0 : i32
    %237 = arith.cmpi sgt, %228, %c0_i32_101 : i32
    %cst_102 = arith.constant 0.000000e+00 : f32
    %238 = arith.select %237, %236, %cst_102 : f32
    %239 = arith.addf %226, %238 : f32
    %240 = arith.addi %227, %228 : i32
    %c19 = arith.constant 19 : index
    %241 = memref.load %arg6[%c19] : memref<32xi32, #tpu.memory_space<smem>>
    %c18_103 = arith.constant 18 : index
    %242 = memref.load %arg5[%c18_103] : memref<32xi32, #tpu.memory_space<smem>>
    %c19_104 = arith.constant 19 : index
    %243 = memref.load %arg5[%c19_104] : memref<32xi32, #tpu.memory_space<smem>>
    %c16_i32_105 = arith.constant 16 : i32
    %244 = arith.muli %242, %c16_i32_105 : i32
    %245 = arith.addi %244, %243 : i32
    %246 = arith.index_cast %245 : i32 to index
    %247 = memref.load %arg10[%246] : memref<256xf32, #tpu.memory_space<smem>>
    %c19_106 = arith.constant 19 : index
    %248 = memref.load %arg7[%c19_106] : memref<32xf32, #tpu.memory_space<smem>>
    %249 = arith.addf %247, %248 : f32
    %c0_i32_107 = arith.constant 0 : i32
    %250 = arith.cmpi sgt, %241, %c0_i32_107 : i32
    %cst_108 = arith.constant 0.000000e+00 : f32
    %251 = arith.select %250, %249, %cst_108 : f32
    %252 = arith.addf %239, %251 : f32
    %253 = arith.addi %240, %241 : i32
    %c20 = arith.constant 20 : index
    %254 = memref.load %arg6[%c20] : memref<32xi32, #tpu.memory_space<smem>>
    %c19_109 = arith.constant 19 : index
    %255 = memref.load %arg5[%c19_109] : memref<32xi32, #tpu.memory_space<smem>>
    %c20_110 = arith.constant 20 : index
    %256 = memref.load %arg5[%c20_110] : memref<32xi32, #tpu.memory_space<smem>>
    %c16_i32_111 = arith.constant 16 : i32
    %257 = arith.muli %255, %c16_i32_111 : i32
    %258 = arith.addi %257, %256 : i32
    %259 = arith.index_cast %258 : i32 to index
    %260 = memref.load %arg10[%259] : memref<256xf32, #tpu.memory_space<smem>>
    %c20_112 = arith.constant 20 : index
    %261 = memref.load %arg7[%c20_112] : memref<32xf32, #tpu.memory_space<smem>>
    %262 = arith.addf %260, %261 : f32
    %c0_i32_113 = arith.constant 0 : i32
    %263 = arith.cmpi sgt, %254, %c0_i32_113 : i32
    %cst_114 = arith.constant 0.000000e+00 : f32
    %264 = arith.select %263, %262, %cst_114 : f32
    %265 = arith.addf %252, %264 : f32
    %266 = arith.addi %253, %254 : i32
    %c21 = arith.constant 21 : index
    %267 = memref.load %arg6[%c21] : memref<32xi32, #tpu.memory_space<smem>>
    %c20_115 = arith.constant 20 : index
    %268 = memref.load %arg5[%c20_115] : memref<32xi32, #tpu.memory_space<smem>>
    %c21_116 = arith.constant 21 : index
    %269 = memref.load %arg5[%c21_116] : memref<32xi32, #tpu.memory_space<smem>>
    %c16_i32_117 = arith.constant 16 : i32
    %270 = arith.muli %268, %c16_i32_117 : i32
    %271 = arith.addi %270, %269 : i32
    %272 = arith.index_cast %271 : i32 to index
    %273 = memref.load %arg10[%272] : memref<256xf32, #tpu.memory_space<smem>>
    %c21_118 = arith.constant 21 : index
    %274 = memref.load %arg7[%c21_118] : memref<32xf32, #tpu.memory_space<smem>>
    %275 = arith.addf %273, %274 : f32
    %c0_i32_119 = arith.constant 0 : i32
    %276 = arith.cmpi sgt, %267, %c0_i32_119 : i32
    %cst_120 = arith.constant 0.000000e+00 : f32
    %277 = arith.select %276, %275, %cst_120 : f32
    %278 = arith.addf %265, %277 : f32
    %279 = arith.addi %266, %267 : i32
    %c22 = arith.constant 22 : index
    %280 = memref.load %arg6[%c22] : memref<32xi32, #tpu.memory_space<smem>>
    %c21_121 = arith.constant 21 : index
    %281 = memref.load %arg5[%c21_121] : memref<32xi32, #tpu.memory_space<smem>>
    %c22_122 = arith.constant 22 : index
    %282 = memref.load %arg5[%c22_122] : memref<32xi32, #tpu.memory_space<smem>>
    %c16_i32_123 = arith.constant 16 : i32
    %283 = arith.muli %281, %c16_i32_123 : i32
    %284 = arith.addi %283, %282 : i32
    %285 = arith.index_cast %284 : i32 to index
    %286 = memref.load %arg10[%285] : memref<256xf32, #tpu.memory_space<smem>>
    %c22_124 = arith.constant 22 : index
    %287 = memref.load %arg7[%c22_124] : memref<32xf32, #tpu.memory_space<smem>>
    %288 = arith.addf %286, %287 : f32
    %c0_i32_125 = arith.constant 0 : i32
    %289 = arith.cmpi sgt, %280, %c0_i32_125 : i32
    %cst_126 = arith.constant 0.000000e+00 : f32
    %290 = arith.select %289, %288, %cst_126 : f32
    %291 = arith.addf %278, %290 : f32
    %292 = arith.addi %279, %280 : i32
    %c23 = arith.constant 23 : index
    %293 = memref.load %arg6[%c23] : memref<32xi32, #tpu.memory_space<smem>>
    %c22_127 = arith.constant 22 : index
    %294 = memref.load %arg5[%c22_127] : memref<32xi32, #tpu.memory_space<smem>>
    %c23_128 = arith.constant 23 : index
    %295 = memref.load %arg5[%c23_128] : memref<32xi32, #tpu.memory_space<smem>>
    %c16_i32_129 = arith.constant 16 : i32
    %296 = arith.muli %294, %c16_i32_129 : i32
    %297 = arith.addi %296, %295 : i32
    %298 = arith.index_cast %297 : i32 to index
    %299 = memref.load %arg10[%298] : memref<256xf32, #tpu.memory_space<smem>>
    %c23_130 = arith.constant 23 : index
    %300 = memref.load %arg7[%c23_130] : memref<32xf32, #tpu.memory_space<smem>>
    %301 = arith.addf %299, %300 : f32
    %c0_i32_131 = arith.constant 0 : i32
    %302 = arith.cmpi sgt, %293, %c0_i32_131 : i32
    %cst_132 = arith.constant 0.000000e+00 : f32
    %303 = arith.select %302, %301, %cst_132 : f32
    %304 = arith.addf %291, %303 : f32
    %305 = arith.addi %292, %293 : i32
    %c16_i32_133 = arith.constant 16 : i32
    %306 = arith.addi %c16_i32_133, %305 : i32
    %c1_i32_134 = arith.constant 1 : i32
    %307 = arith.subi %306, %c1_i32_134 : i32
    %308 = arith.index_cast %307 : i32 to index
    %309 = memref.load %arg5[%308] : memref<32xi32, #tpu.memory_space<smem>>
    %310 = arith.index_cast %309 : i32 to index
    %311 = memref.load %arg9[%310] : memref<16xf32, #tpu.memory_space<smem>>
    %312 = arith.addf %304, %311 : f32
    %313 = arith.addf %208, %312 : f32
    %314 = arith.addi %209, %305 : i32
    %c24 = arith.constant 24 : index
    %315 = memref.load %arg5[%c24] : memref<32xi32, #tpu.memory_space<smem>>
    %316 = arith.index_cast %315 : i32 to index
    %317 = memref.load %arg8[%316] : memref<16xf32, #tpu.memory_space<smem>>
    %c24_135 = arith.constant 24 : index
    %318 = memref.load %arg7[%c24_135] : memref<32xf32, #tpu.memory_space<smem>>
    %319 = arith.addf %317, %318 : f32
    %c25 = arith.constant 25 : index
    %320 = memref.load %arg6[%c25] : memref<32xi32, #tpu.memory_space<smem>>
    %c24_136 = arith.constant 24 : index
    %321 = memref.load %arg5[%c24_136] : memref<32xi32, #tpu.memory_space<smem>>
    %c25_137 = arith.constant 25 : index
    %322 = memref.load %arg5[%c25_137] : memref<32xi32, #tpu.memory_space<smem>>
    %c16_i32_138 = arith.constant 16 : i32
    %323 = arith.muli %321, %c16_i32_138 : i32
    %324 = arith.addi %323, %322 : i32
    %325 = arith.index_cast %324 : i32 to index
    %326 = memref.load %arg10[%325] : memref<256xf32, #tpu.memory_space<smem>>
    %c25_139 = arith.constant 25 : index
    %327 = memref.load %arg7[%c25_139] : memref<32xf32, #tpu.memory_space<smem>>
    %328 = arith.addf %326, %327 : f32
    %c0_i32_140 = arith.constant 0 : i32
    %329 = arith.cmpi sgt, %320, %c0_i32_140 : i32
    %cst_141 = arith.constant 0.000000e+00 : f32
    %330 = arith.select %329, %328, %cst_141 : f32
    %331 = arith.addf %319, %330 : f32
    %c1_i32_142 = arith.constant 1 : i32
    %332 = arith.addi %c1_i32_142, %320 : i32
    %c26 = arith.constant 26 : index
    %333 = memref.load %arg6[%c26] : memref<32xi32, #tpu.memory_space<smem>>
    %c25_143 = arith.constant 25 : index
    %334 = memref.load %arg5[%c25_143] : memref<32xi32, #tpu.memory_space<smem>>
    %c26_144 = arith.constant 26 : index
    %335 = memref.load %arg5[%c26_144] : memref<32xi32, #tpu.memory_space<smem>>
    %c16_i32_145 = arith.constant 16 : i32
    %336 = arith.muli %334, %c16_i32_145 : i32
    %337 = arith.addi %336, %335 : i32
    %338 = arith.index_cast %337 : i32 to index
    %339 = memref.load %arg10[%338] : memref<256xf32, #tpu.memory_space<smem>>
    %c26_146 = arith.constant 26 : index
    %340 = memref.load %arg7[%c26_146] : memref<32xf32, #tpu.memory_space<smem>>
    %341 = arith.addf %339, %340 : f32
    %c0_i32_147 = arith.constant 0 : i32
    %342 = arith.cmpi sgt, %333, %c0_i32_147 : i32
    %cst_148 = arith.constant 0.000000e+00 : f32
    %343 = arith.select %342, %341, %cst_148 : f32
    %344 = arith.addf %331, %343 : f32
    %345 = arith.addi %332, %333 : i32
    %c27 = arith.constant 27 : index
    %346 = memref.load %arg6[%c27] : memref<32xi32, #tpu.memory_space<smem>>
    %c26_149 = arith.constant 26 : index
    %347 = memref.load %arg5[%c26_149] : memref<32xi32, #tpu.memory_space<smem>>
    %c27_150 = arith.constant 27 : index
    %348 = memref.load %arg5[%c27_150] : memref<32xi32, #tpu.memory_space<smem>>
    %c16_i32_151 = arith.constant 16 : i32
    %349 = arith.muli %347, %c16_i32_151 : i32
    %350 = arith.addi %349, %348 : i32
    %351 = arith.index_cast %350 : i32 to index
    %352 = memref.load %arg10[%351] : memref<256xf32, #tpu.memory_space<smem>>
    %c27_152 = arith.constant 27 : index
    %353 = memref.load %arg7[%c27_152] : memref<32xf32, #tpu.memory_space<smem>>
    %354 = arith.addf %352, %353 : f32
    %c0_i32_153 = arith.constant 0 : i32
    %355 = arith.cmpi sgt, %346, %c0_i32_153 : i32
    %cst_154 = arith.constant 0.000000e+00 : f32
    %356 = arith.select %355, %354, %cst_154 : f32
    %357 = arith.addf %344, %356 : f32
    %358 = arith.addi %345, %346 : i32
    %c28 = arith.constant 28 : index
    %359 = memref.load %arg6[%c28] : memref<32xi32, #tpu.memory_space<smem>>
    %c27_155 = arith.constant 27 : index
    %360 = memref.load %arg5[%c27_155] : memref<32xi32, #tpu.memory_space<smem>>
    %c28_156 = arith.constant 28 : index
    %361 = memref.load %arg5[%c28_156] : memref<32xi32, #tpu.memory_space<smem>>
    %c16_i32_157 = arith.constant 16 : i32
    %362 = arith.muli %360, %c16_i32_157 : i32
    %363 = arith.addi %362, %361 : i32
    %364 = arith.index_cast %363 : i32 to index
    %365 = memref.load %arg10[%364] : memref<256xf32, #tpu.memory_space<smem>>
    %c28_158 = arith.constant 28 : index
    %366 = memref.load %arg7[%c28_158] : memref<32xf32, #tpu.memory_space<smem>>
    %367 = arith.addf %365, %366 : f32
    %c0_i32_159 = arith.constant 0 : i32
    %368 = arith.cmpi sgt, %359, %c0_i32_159 : i32
    %cst_160 = arith.constant 0.000000e+00 : f32
    %369 = arith.select %368, %367, %cst_160 : f32
    %370 = arith.addf %357, %369 : f32
    %371 = arith.addi %358, %359 : i32
    %c29 = arith.constant 29 : index
    %372 = memref.load %arg6[%c29] : memref<32xi32, #tpu.memory_space<smem>>
    %c28_161 = arith.constant 28 : index
    %373 = memref.load %arg5[%c28_161] : memref<32xi32, #tpu.memory_space<smem>>
    %c29_162 = arith.constant 29 : index
    %374 = memref.load %arg5[%c29_162] : memref<32xi32, #tpu.memory_space<smem>>
    %c16_i32_163 = arith.constant 16 : i32
    %375 = arith.muli %373, %c16_i32_163 : i32
    %376 = arith.addi %375, %374 : i32
    %377 = arith.index_cast %376 : i32 to index
    %378 = memref.load %arg10[%377] : memref<256xf32, #tpu.memory_space<smem>>
    %c29_164 = arith.constant 29 : index
    %379 = memref.load %arg7[%c29_164] : memref<32xf32, #tpu.memory_space<smem>>
    %380 = arith.addf %378, %379 : f32
    %c0_i32_165 = arith.constant 0 : i32
    %381 = arith.cmpi sgt, %372, %c0_i32_165 : i32
    %cst_166 = arith.constant 0.000000e+00 : f32
    %382 = arith.select %381, %380, %cst_166 : f32
    %383 = arith.addf %370, %382 : f32
    %384 = arith.addi %371, %372 : i32
    %c30 = arith.constant 30 : index
    %385 = memref.load %arg6[%c30] : memref<32xi32, #tpu.memory_space<smem>>
    %c29_167 = arith.constant 29 : index
    %386 = memref.load %arg5[%c29_167] : memref<32xi32, #tpu.memory_space<smem>>
    %c30_168 = arith.constant 30 : index
    %387 = memref.load %arg5[%c30_168] : memref<32xi32, #tpu.memory_space<smem>>
    %c16_i32_169 = arith.constant 16 : i32
    %388 = arith.muli %386, %c16_i32_169 : i32
    %389 = arith.addi %388, %387 : i32
    %390 = arith.index_cast %389 : i32 to index
    %391 = memref.load %arg10[%390] : memref<256xf32, #tpu.memory_space<smem>>
    %c30_170 = arith.constant 30 : index
    %392 = memref.load %arg7[%c30_170] : memref<32xf32, #tpu.memory_space<smem>>
    %393 = arith.addf %391, %392 : f32
    %c0_i32_171 = arith.constant 0 : i32
    %394 = arith.cmpi sgt, %385, %c0_i32_171 : i32
    %cst_172 = arith.constant 0.000000e+00 : f32
    %395 = arith.select %394, %393, %cst_172 : f32
    %396 = arith.addf %383, %395 : f32
    %397 = arith.addi %384, %385 : i32
    %c31 = arith.constant 31 : index
    %398 = memref.load %arg6[%c31] : memref<32xi32, #tpu.memory_space<smem>>
    %c30_173 = arith.constant 30 : index
    %399 = memref.load %arg5[%c30_173] : memref<32xi32, #tpu.memory_space<smem>>
    %c31_174 = arith.constant 31 : index
    %400 = memref.load %arg5[%c31_174] : memref<32xi32, #tpu.memory_space<smem>>
    %c16_i32_175 = arith.constant 16 : i32
    %401 = arith.muli %399, %c16_i32_175 : i32
    %402 = arith.addi %401, %400 : i32
    %403 = arith.index_cast %402 : i32 to index
    %404 = memref.load %arg10[%403] : memref<256xf32, #tpu.memory_space<smem>>
    %c31_176 = arith.constant 31 : index
    %405 = memref.load %arg7[%c31_176] : memref<32xf32, #tpu.memory_space<smem>>
    %406 = arith.addf %404, %405 : f32
    %c0_i32_177 = arith.constant 0 : i32
    %407 = arith.cmpi sgt, %398, %c0_i32_177 : i32
    %cst_178 = arith.constant 0.000000e+00 : f32
    %408 = arith.select %407, %406, %cst_178 : f32
    %409 = arith.addf %396, %408 : f32
    %410 = arith.addi %397, %398 : i32
    %c24_i32 = arith.constant 24 : i32
    %411 = arith.addi %c24_i32, %410 : i32
    %c1_i32_179 = arith.constant 1 : i32
    %412 = arith.subi %411, %c1_i32_179 : i32
    %413 = arith.index_cast %412 : i32 to index
    %414 = memref.load %arg5[%413] : memref<32xi32, #tpu.memory_space<smem>>
    %415 = arith.index_cast %414 : i32 to index
    %416 = memref.load %arg9[%415] : memref<16xf32, #tpu.memory_space<smem>>
    %417 = arith.addf %409, %416 : f32
    %418 = arith.addf %313, %417 : f32
    %419 = arith.addi %314, %410 : i32
    %420 = arith.sitofp %419 : i32 to f32
    %c0_180 = arith.constant 0 : index
    %c0_181 = arith.constant 0 : index
    %421 = vector.load %arg4[%c0_180, %c0_181] : memref<16x16xf32, #tpu.memory_space<vmem>>, vector<16x16xf32>
    %cst_182 = arith.constant dense<0xFF800000> : vector<16xf32>
    %422 = vector.multi_reduction <maximumf>, %421, %cst_182 [0] : vector<16x16xf32> to vector<16xf32>
    %423 = vector.shape_cast %422 : vector<16xf32> to vector<1x16xf32>
    %424 = vector.broadcast %423 : vector<1x16xf32> to vector<16x16xf32>
    %425 = arith.subf %421, %424 : vector<16x16xf32>
    %426 = math.exp %425 : vector<16x16xf32>
    %c0_183 = arith.constant 0 : index
    %c0_184 = arith.constant 0 : index
    %427 = vector.load %arg2[%c0_183, %c0_184] : memref<1x16xf32, #tpu.memory_space<vmem>>, vector<1x16xf32>
    %c0_185 = arith.constant 0 : index
    %c0_186 = arith.constant 0 : index
    %c0_187 = arith.constant 0 : index
    %428 = vector.load %arg0[%c0_185, %c0_186, %c0_187] : memref<4x8x16xf32, #tpu.memory_space<vmem>>, vector<4x1x16xf32>
    %429 = vector.shape_cast %428 : vector<4x1x16xf32> to vector<4x16xf32>
    %430 = vector.broadcast %427 : vector<1x16xf32> to vector<4x16xf32>
    %431 = arith.addf %430, %429 : vector<4x16xf32>
    %c0_188 = arith.constant 0 : index
    %c1_189 = arith.constant 1 : index
    %c0_190 = arith.constant 0 : index
    %432 = vector.load %arg0[%c0_188, %c1_189, %c0_190] : memref<4x8x16xf32, #tpu.memory_space<vmem>>, vector<4x1x16xf32>
    %433 = vector.shape_cast %432 : vector<4x1x16xf32> to vector<4x16xf32>
    %c0_191 = arith.constant 0 : index
    %c1_192 = arith.constant 1 : index
    %434 = vector.load %arg1[%c0_191, %c1_192] : memref<4x8xf32, #tpu.memory_space<vmem>>, vector<4x1xf32>
    %cst_193 = arith.constant dense<0xFF800000> : vector<4xf32>
    %435 = vector.multi_reduction <maximumf>, %431, %cst_193 [1] : vector<4x16xf32> to vector<4xf32>
    %436 = vector.shape_cast %435 : vector<4xf32> to vector<4x1xf32>
    %437 = vector.broadcast %436 : vector<4x1xf32> to vector<4x16xf32>
    %438 = arith.subf %431, %437 : vector<4x16xf32>
    %439 = math.exp %438 : vector<4x16xf32>
    %cst_194 = arith.constant dense<0.000000e+00> : vector<4x16xf32>
    %440 = tpu.matmul %439, %426, %cst_194 {dimension_numbers = #tpu.dot_dimension_numbers<[1], [0], [0], [1], [0, 0, 1, 1], [], []>} : vector<4x16xf32>, vector<16x16xf32>, vector<4x16xf32> -> vector<4x16xf32>
    %cst_195 = arith.constant 1.000000e-30 : f32
    %441 = vector.broadcast %cst_195 : f32 to vector<4x16xf32>
    %442 = arith.maximumf %440, %441 : vector<4x16xf32>
    %443 = vector.broadcast %436 : vector<4x1xf32> to vector<4x16xf32>
    %444 = arith.addf %433, %443 : vector<4x16xf32>
    %445 = vector.broadcast %423 : vector<1x16xf32> to vector<4x16xf32>
    %446 = arith.addf %444, %445 : vector<4x16xf32>
    %447 = math.log %442 : vector<4x16xf32>
    %448 = arith.addf %446, %447 : vector<4x16xf32>
    %cst_196 = arith.constant 0.000000e+00 : f32
    %449 = vector.broadcast %cst_196 : f32 to vector<4x1xf32>
    %450 = arith.cmpf ogt, %434, %449 : vector<4x1xf32>
    %451 = vector.shape_cast %450 : vector<4x1xi1> to vector<4x1xi1>
    %452 = vector.broadcast %451 : vector<4x1xi1> to vector<4x16xi1>
    %453 = arith.select %452, %448, %431 : vector<4x16xi1>, vector<4x16xf32>
    %c0_197 = arith.constant 0 : index
    %c2_198 = arith.constant 2 : index
    %c0_199 = arith.constant 0 : index
    %454 = vector.load %arg0[%c0_197, %c2_198, %c0_199] : memref<4x8x16xf32, #tpu.memory_space<vmem>>, vector<4x1x16xf32>
    %455 = vector.shape_cast %454 : vector<4x1x16xf32> to vector<4x16xf32>
    %c0_200 = arith.constant 0 : index
    %c2_201 = arith.constant 2 : index
    %456 = vector.load %arg1[%c0_200, %c2_201] : memref<4x8xf32, #tpu.memory_space<vmem>>, vector<4x1xf32>
    %cst_202 = arith.constant dense<0xFF800000> : vector<4xf32>
    %457 = vector.multi_reduction <maximumf>, %453, %cst_202 [1] : vector<4x16xf32> to vector<4xf32>
    %458 = vector.shape_cast %457 : vector<4xf32> to vector<4x1xf32>
    %459 = vector.broadcast %458 : vector<4x1xf32> to vector<4x16xf32>
    %460 = arith.subf %453, %459 : vector<4x16xf32>
    %461 = math.exp %460 : vector<4x16xf32>
    %cst_203 = arith.constant dense<0.000000e+00> : vector<4x16xf32>
    %462 = tpu.matmul %461, %426, %cst_203 {dimension_numbers = #tpu.dot_dimension_numbers<[1], [0], [0], [1], [0, 0, 1, 1], [], []>} : vector<4x16xf32>, vector<16x16xf32>, vector<4x16xf32> -> vector<4x16xf32>
    %cst_204 = arith.constant 1.000000e-30 : f32
    %463 = vector.broadcast %cst_204 : f32 to vector<4x16xf32>
    %464 = arith.maximumf %462, %463 : vector<4x16xf32>
    %465 = vector.broadcast %458 : vector<4x1xf32> to vector<4x16xf32>
    %466 = arith.addf %455, %465 : vector<4x16xf32>
    %467 = vector.broadcast %423 : vector<1x16xf32> to vector<4x16xf32>
    %468 = arith.addf %466, %467 : vector<4x16xf32>
    %469 = math.log %464 : vector<4x16xf32>
    %470 = arith.addf %468, %469 : vector<4x16xf32>
    %cst_205 = arith.constant 0.000000e+00 : f32
    %471 = vector.broadcast %cst_205 : f32 to vector<4x1xf32>
    %472 = arith.cmpf ogt, %456, %471 : vector<4x1xf32>
    %473 = vector.shape_cast %472 : vector<4x1xi1> to vector<4x1xi1>
    %474 = vector.broadcast %473 : vector<4x1xi1> to vector<4x16xi1>
    %475 = arith.select %474, %470, %453 : vector<4x16xi1>, vector<4x16xf32>
    %c0_206 = arith.constant 0 : index
    %c3_207 = arith.constant 3 : index
    %c0_208 = arith.constant 0 : index
    %476 = vector.load %arg0[%c0_206, %c3_207, %c0_208] : memref<4x8x16xf32, #tpu.memory_space<vmem>>, vector<4x1x16xf32>
    %477 = vector.shape_cast %476 : vector<4x1x16xf32> to vector<4x16xf32>
    %c0_209 = arith.constant 0 : index
    %c3_210 = arith.constant 3 : index
    %478 = vector.load %arg1[%c0_209, %c3_210] : memref<4x8xf32, #tpu.memory_space<vmem>>, vector<4x1xf32>
    %cst_211 = arith.constant dense<0xFF800000> : vector<4xf32>
    %479 = vector.multi_reduction <maximumf>, %475, %cst_211 [1] : vector<4x16xf32> to vector<4xf32>
    %480 = vector.shape_cast %479 : vector<4xf32> to vector<4x1xf32>
    %481 = vector.broadcast %480 : vector<4x1xf32> to vector<4x16xf32>
    %482 = arith.subf %475, %481 : vector<4x16xf32>
    %483 = math.exp %482 : vector<4x16xf32>
    %cst_212 = arith.constant dense<0.000000e+00> : vector<4x16xf32>
    %484 = tpu.matmul %483, %426, %cst_212 {dimension_numbers = #tpu.dot_dimension_numbers<[1], [0], [0], [1], [0, 0, 1, 1], [], []>} : vector<4x16xf32>, vector<16x16xf32>, vector<4x16xf32> -> vector<4x16xf32>
    %cst_213 = arith.constant 1.000000e-30 : f32
    %485 = vector.broadcast %cst_213 : f32 to vector<4x16xf32>
    %486 = arith.maximumf %484, %485 : vector<4x16xf32>
    %487 = vector.broadcast %480 : vector<4x1xf32> to vector<4x16xf32>
    %488 = arith.addf %477, %487 : vector<4x16xf32>
    %489 = vector.broadcast %423 : vector<1x16xf32> to vector<4x16xf32>
    %490 = arith.addf %488, %489 : vector<4x16xf32>
    %491 = math.log %486 : vector<4x16xf32>
    %492 = arith.addf %490, %491 : vector<4x16xf32>
    %cst_214 = arith.constant 0.000000e+00 : f32
    %493 = vector.broadcast %cst_214 : f32 to vector<4x1xf32>
    %494 = arith.cmpf ogt, %478, %493 : vector<4x1xf32>
    %495 = vector.shape_cast %494 : vector<4x1xi1> to vector<4x1xi1>
    %496 = vector.broadcast %495 : vector<4x1xi1> to vector<4x16xi1>
    %497 = arith.select %496, %492, %475 : vector<4x16xi1>, vector<4x16xf32>
    %c0_215 = arith.constant 0 : index
    %c4_216 = arith.constant 4 : index
    %c0_217 = arith.constant 0 : index
    %498 = vector.load %arg0[%c0_215, %c4_216, %c0_217] : memref<4x8x16xf32, #tpu.memory_space<vmem>>, vector<4x1x16xf32>
    %499 = vector.shape_cast %498 : vector<4x1x16xf32> to vector<4x16xf32>
    %c0_218 = arith.constant 0 : index
    %c4_219 = arith.constant 4 : index
    %500 = vector.load %arg1[%c0_218, %c4_219] : memref<4x8xf32, #tpu.memory_space<vmem>>, vector<4x1xf32>
    %cst_220 = arith.constant dense<0xFF800000> : vector<4xf32>
    %501 = vector.multi_reduction <maximumf>, %497, %cst_220 [1] : vector<4x16xf32> to vector<4xf32>
    %502 = vector.shape_cast %501 : vector<4xf32> to vector<4x1xf32>
    %503 = vector.broadcast %502 : vector<4x1xf32> to vector<4x16xf32>
    %504 = arith.subf %497, %503 : vector<4x16xf32>
    %505 = math.exp %504 : vector<4x16xf32>
    %cst_221 = arith.constant dense<0.000000e+00> : vector<4x16xf32>
    %506 = tpu.matmul %505, %426, %cst_221 {dimension_numbers = #tpu.dot_dimension_numbers<[1], [0], [0], [1], [0, 0, 1, 1], [], []>} : vector<4x16xf32>, vector<16x16xf32>, vector<4x16xf32> -> vector<4x16xf32>
    %cst_222 = arith.constant 1.000000e-30 : f32
    %507 = vector.broadcast %cst_222 : f32 to vector<4x16xf32>
    %508 = arith.maximumf %506, %507 : vector<4x16xf32>
    %509 = vector.broadcast %502 : vector<4x1xf32> to vector<4x16xf32>
    %510 = arith.addf %499, %509 : vector<4x16xf32>
    %511 = vector.broadcast %423 : vector<1x16xf32> to vector<4x16xf32>
    %512 = arith.addf %510, %511 : vector<4x16xf32>
    %513 = math.log %508 : vector<4x16xf32>
    %514 = arith.addf %512, %513 : vector<4x16xf32>
    %cst_223 = arith.constant 0.000000e+00 : f32
    %515 = vector.broadcast %cst_223 : f32 to vector<4x1xf32>
    %516 = arith.cmpf ogt, %500, %515 : vector<4x1xf32>
    %517 = vector.shape_cast %516 : vector<4x1xi1> to vector<4x1xi1>
    %518 = vector.broadcast %517 : vector<4x1xi1> to vector<4x16xi1>
    %519 = arith.select %518, %514, %497 : vector<4x16xi1>, vector<4x16xf32>
    %c0_224 = arith.constant 0 : index
    %c5_225 = arith.constant 5 : index
    %c0_226 = arith.constant 0 : index
    %520 = vector.load %arg0[%c0_224, %c5_225, %c0_226] : memref<4x8x16xf32, #tpu.memory_space<vmem>>, vector<4x1x16xf32>
    %521 = vector.shape_cast %520 : vector<4x1x16xf32> to vector<4x16xf32>
    %c0_227 = arith.constant 0 : index
    %c5_228 = arith.constant 5 : index
    %522 = vector.load %arg1[%c0_227, %c5_228] : memref<4x8xf32, #tpu.memory_space<vmem>>, vector<4x1xf32>
    %cst_229 = arith.constant dense<0xFF800000> : vector<4xf32>
    %523 = vector.multi_reduction <maximumf>, %519, %cst_229 [1] : vector<4x16xf32> to vector<4xf32>
    %524 = vector.shape_cast %523 : vector<4xf32> to vector<4x1xf32>
    %525 = vector.broadcast %524 : vector<4x1xf32> to vector<4x16xf32>
    %526 = arith.subf %519, %525 : vector<4x16xf32>
    %527 = math.exp %526 : vector<4x16xf32>
    %cst_230 = arith.constant dense<0.000000e+00> : vector<4x16xf32>
    %528 = tpu.matmul %527, %426, %cst_230 {dimension_numbers = #tpu.dot_dimension_numbers<[1], [0], [0], [1], [0, 0, 1, 1], [], []>} : vector<4x16xf32>, vector<16x16xf32>, vector<4x16xf32> -> vector<4x16xf32>
    %cst_231 = arith.constant 1.000000e-30 : f32
    %529 = vector.broadcast %cst_231 : f32 to vector<4x16xf32>
    %530 = arith.maximumf %528, %529 : vector<4x16xf32>
    %531 = vector.broadcast %524 : vector<4x1xf32> to vector<4x16xf32>
    %532 = arith.addf %521, %531 : vector<4x16xf32>
    %533 = vector.broadcast %423 : vector<1x16xf32> to vector<4x16xf32>
    %534 = arith.addf %532, %533 : vector<4x16xf32>
    %535 = math.log %530 : vector<4x16xf32>
    %536 = arith.addf %534, %535 : vector<4x16xf32>
    %cst_232 = arith.constant 0.000000e+00 : f32
    %537 = vector.broadcast %cst_232 : f32 to vector<4x1xf32>
    %538 = arith.cmpf ogt, %522, %537 : vector<4x1xf32>
    %539 = vector.shape_cast %538 : vector<4x1xi1> to vector<4x1xi1>
    %540 = vector.broadcast %539 : vector<4x1xi1> to vector<4x16xi1>
    %541 = arith.select %540, %536, %519 : vector<4x16xi1>, vector<4x16xf32>
    %c0_233 = arith.constant 0 : index
    %c6_234 = arith.constant 6 : index
    %c0_235 = arith.constant 0 : index
    %542 = vector.load %arg0[%c0_233, %c6_234, %c0_235] : memref<4x8x16xf32, #tpu.memory_space<vmem>>, vector<4x1x16xf32>
    %543 = vector.shape_cast %542 : vector<4x1x16xf32> to vector<4x16xf32>
    %c0_236 = arith.constant 0 : index
    %c6_237 = arith.constant 6 : index
    %544 = vector.load %arg1[%c0_236, %c6_237] : memref<4x8xf32, #tpu.memory_space<vmem>>, vector<4x1xf32>
    %cst_238 = arith.constant dense<0xFF800000> : vector<4xf32>
    %545 = vector.multi_reduction <maximumf>, %541, %cst_238 [1] : vector<4x16xf32> to vector<4xf32>
    %546 = vector.shape_cast %545 : vector<4xf32> to vector<4x1xf32>
    %547 = vector.broadcast %546 : vector<4x1xf32> to vector<4x16xf32>
    %548 = arith.subf %541, %547 : vector<4x16xf32>
    %549 = math.exp %548 : vector<4x16xf32>
    %cst_239 = arith.constant dense<0.000000e+00> : vector<4x16xf32>
    %550 = tpu.matmul %549, %426, %cst_239 {dimension_numbers = #tpu.dot_dimension_numbers<[1], [0], [0], [1], [0, 0, 1, 1], [], []>} : vector<4x16xf32>, vector<16x16xf32>, vector<4x16xf32> -> vector<4x16xf32>
    %cst_240 = arith.constant 1.000000e-30 : f32
    %551 = vector.broadcast %cst_240 : f32 to vector<4x16xf32>
    %552 = arith.maximumf %550, %551 : vector<4x16xf32>
    %553 = vector.broadcast %546 : vector<4x1xf32> to vector<4x16xf32>
    %554 = arith.addf %543, %553 : vector<4x16xf32>
    %555 = vector.broadcast %423 : vector<1x16xf32> to vector<4x16xf32>
    %556 = arith.addf %554, %555 : vector<4x16xf32>
    %557 = math.log %552 : vector<4x16xf32>
    %558 = arith.addf %556, %557 : vector<4x16xf32>
    %cst_241 = arith.constant 0.000000e+00 : f32
    %559 = vector.broadcast %cst_241 : f32 to vector<4x1xf32>
    %560 = arith.cmpf ogt, %544, %559 : vector<4x1xf32>
    %561 = vector.shape_cast %560 : vector<4x1xi1> to vector<4x1xi1>
    %562 = vector.broadcast %561 : vector<4x1xi1> to vector<4x16xi1>
    %563 = arith.select %562, %558, %541 : vector<4x16xi1>, vector<4x16xf32>
    %c0_242 = arith.constant 0 : index
    %c7_243 = arith.constant 7 : index
    %c0_244 = arith.constant 0 : index
    %564 = vector.load %arg0[%c0_242, %c7_243, %c0_244] : memref<4x8x16xf32, #tpu.memory_space<vmem>>, vector<4x1x16xf32>
    %565 = vector.shape_cast %564 : vector<4x1x16xf32> to vector<4x16xf32>
    %c0_245 = arith.constant 0 : index
    %c7_246 = arith.constant 7 : index
    %566 = vector.load %arg1[%c0_245, %c7_246] : memref<4x8xf32, #tpu.memory_space<vmem>>, vector<4x1xf32>
    %cst_247 = arith.constant dense<0xFF800000> : vector<4xf32>
    %567 = vector.multi_reduction <maximumf>, %563, %cst_247 [1] : vector<4x16xf32> to vector<4xf32>
    %568 = vector.shape_cast %567 : vector<4xf32> to vector<4x1xf32>
    %569 = vector.broadcast %568 : vector<4x1xf32> to vector<4x16xf32>
    %570 = arith.subf %563, %569 : vector<4x16xf32>
    %571 = math.exp %570 : vector<4x16xf32>
    %cst_248 = arith.constant dense<0.000000e+00> : vector<4x16xf32>
    %572 = tpu.matmul %571, %426, %cst_248 {dimension_numbers = #tpu.dot_dimension_numbers<[1], [0], [0], [1], [0, 0, 1, 1], [], []>} : vector<4x16xf32>, vector<16x16xf32>, vector<4x16xf32> -> vector<4x16xf32>
    %cst_249 = arith.constant 1.000000e-30 : f32
    %573 = vector.broadcast %cst_249 : f32 to vector<4x16xf32>
    %574 = arith.maximumf %572, %573 : vector<4x16xf32>
    %575 = vector.broadcast %568 : vector<4x1xf32> to vector<4x16xf32>
    %576 = arith.addf %565, %575 : vector<4x16xf32>
    %577 = vector.broadcast %423 : vector<1x16xf32> to vector<4x16xf32>
    %578 = arith.addf %576, %577 : vector<4x16xf32>
    %579 = math.log %574 : vector<4x16xf32>
    %580 = arith.addf %578, %579 : vector<4x16xf32>
    %cst_250 = arith.constant 0.000000e+00 : f32
    %581 = vector.broadcast %cst_250 : f32 to vector<4x1xf32>
    %582 = arith.cmpf ogt, %566, %581 : vector<4x1xf32>
    %583 = vector.shape_cast %582 : vector<4x1xi1> to vector<4x1xi1>
    %584 = vector.broadcast %583 : vector<4x1xi1> to vector<4x16xi1>
    %585 = arith.select %584, %580, %563 : vector<4x16xi1>, vector<4x16xf32>
    %c0_251 = arith.constant 0 : index
    %c0_252 = arith.constant 0 : index
    %586 = vector.load %arg3[%c0_251, %c0_252] : memref<1x16xf32, #tpu.memory_space<vmem>>, vector<1x16xf32>
    %587 = vector.broadcast %586 : vector<1x16xf32> to vector<4x16xf32>
    %588 = arith.addf %585, %587 : vector<4x16xf32>
    %cst_253 = arith.constant dense<0xFF800000> : vector<4xf32>
    %589 = vector.multi_reduction <maximumf>, %588, %cst_253 [1] : vector<4x16xf32> to vector<4xf32>
    %590 = vector.shape_cast %589 : vector<4xf32> to vector<4x1xf32>
    %591 = vector.broadcast %590 : vector<4x1xf32> to vector<4x16xf32>
    %592 = arith.subf %588, %591 : vector<4x16xf32>
    %593 = math.exp %592 : vector<4x16xf32>
    %cst_254 = arith.constant dense<0.000000e+00> : vector<4xf32>
    %594 = vector.multi_reduction <add>, %593, %cst_254 [1] : vector<4x16xf32> to vector<4xf32>
    %595 = vector.shape_cast %594 : vector<4xf32> to vector<4x1xf32>
    %596 = math.log %595 : vector<4x1xf32>
    %597 = arith.addf %590, %596 : vector<4x1xf32>
    %cst_255 = arith.constant dense<0.000000e+00> : vector<1xf32>
    %598 = vector.multi_reduction <add>, %597, %cst_255 [0] : vector<4x1xf32> to vector<1xf32>
    %599 = vector.shape_cast %598 : vector<1xf32> to vector<1x1xf32>
    %600 = vector.broadcast %418 : f32 to vector<1x1xf32>
    %601 = arith.subf %600, %599 : vector<1x1xf32>
    %602 = vector.broadcast %420 : f32 to vector<1x1xf32>
    %603 = arith.divf %601, %602 : vector<1x1xf32>
    %c0_256 = arith.constant 0 : index
    %c0_257 = arith.constant 0 : index
    %604 = vector.load %arg11[%c0_256, %c0_257] : memref<1x1xf32, #tpu.memory_space<vmem>>, vector<1x1xf32>
    tpu.vector_store %arg11[%c0_256, %c0_257], %603 {strides = array<i32>} : memref<1x1xf32, #tpu.memory_space<vmem>>, vector<1x1xf32>,
    return
  }
}

</mosaic_0001>

<llo_original>
// kernel: crf_forward.1
$region0: #{crf_forward.1}
  #allocation0 [shape = 'u32[]', space=smem, size = 0x4, offset = 0x4, fixed_abs, tag = 'smem constant byte address 0x4 - core index']
  #allocation1 [shape = 'u32[72,128]{1,0:T(1,128)}', space=vmem, size = 0x9000, scoped, tag = 'internal scratch']
  %s0 = inlined_call_operand.vmem [shape: f32[4,8,16], index: 0, kind: input, shape index: {}]
  %s1 = inlined_call_operand.vmem [shape: f32[4,8], index: 1, kind: input, shape index: {}]
  %s2 = inlined_call_operand.vmem [shape: f32[1,16], index: 2, kind: input, shape index: {}, may-alias: {2,8}]
  %s3 = inlined_call_operand.vmem [shape: f32[1,16], index: 3, kind: input, shape index: {}, may-alias: {3,9}]
  %s4 = inlined_call_operand.vmem [shape: f32[16,16], index: 4, kind: input, shape index: {}]
  %s5 = inlined_call_operand.vmem [shape: s32[32], index: 5, kind: input, shape index: {}]
  %s6 = inlined_call_operand.vmem [shape: s32[32], index: 6, kind: input, shape index: {}]
  %s7 = inlined_call_operand.vmem [shape: f32[32], index: 7, kind: input, shape index: {}]
  %s8 = inlined_call_operand.vmem [shape: f32[16], index: 8, kind: input, shape index: {}, may-alias: {2,8}]
  %s9 = inlined_call_operand.vmem [shape: f32[16], index: 9, kind: input, shape index: {}, may-alias: {3,9}]
  %s10 = inlined_call_operand.vmem [shape: f32[256], index: 10, kind: input, shape index: {}]
  %s11 = inlined_call_operand.hbm [shape: f32[1,1], index: 11, kind: output, shape index: {}]
  %s12 = sld [smem:[#allocation0]]
  $region78: #{crf_forward.1} parent=0
    _
  %s14 = ssub.s32 1, %s12
  %s15 = scalar_select 0, %s14, %s12
  $region1: #{crf_forward.1} parent=0
    #allocation2 [shape = 'u8[512]{0}', space=smem, size = 0x200, scoped, tag = 'input window, operand 5, single buffered']
    #allocation3 [shape = 's32[1]{0}', space=sflag, size = 0x4, scoped, tag = 'scoped memory for crf_forward.1']
    #allocation4 [shape = 's32[1]{0}', space=sflag, size = 0x4, scoped, tag = 'scoped memory for crf_forward.1']
    #allocation5 [shape = 'u8[512]{0}', space=smem, size = 0x200, scoped, tag = 'input window, operand 6, single buffered']
    #allocation6 [shape = 's32[1]{0}', space=sflag, size = 0x4, scoped, tag = 'scoped memory for crf_forward.1']
    #allocation7 [shape = 'u8[512]{0}', space=smem, size = 0x200, scoped, tag = 'input window, operand 7, single buffered']
    #allocation8 [shape = 'u8[512]{0}', space=smem, size = 0x200, scoped, tag = 'input window, operand 8, single buffered']
    #allocation9 [shape = 's32[1]{0}', space=sflag, size = 0x4, scoped, tag = 'scoped memory for crf_forward.1']
    #allocation10 [shape = 'u8[512]{0}', space=smem, size = 0x200, scoped, tag = 'input window, operand 9, single buffered']
    #allocation11 [shape = 'u8[1024]{0}', space=smem, size = 0x400, scoped, tag = 'input window, operand 10, single buffered']
    #allocation12 [shape = 's32[1]{0}', space=sflag, size = 0x4, scoped, tag = 'scoped memory for crf_forward.1']
    #allocation13 [shape = 'u8[512]{0}', space=vmem, size = 0x400, scoped, tag = 'output window, operand 0, single buffered']
    %16 = vsyncpa [#allocation4], 0
    %17 = vsyncpa [#allocation6], 0
    %18 = vsyncpa [#allocation9], 0
    %19 = vsyncpa [#allocation12], 0
    %20 = vsyncpa [#allocation3], 0
    // Predicated region
    $region2: #{crf_forward.1} parent=1 // pred_check
      _
    $region3: #{crf_forward.1} parent=1 // pred_check_branch
      %22 = sbr.rel (0) target = $region5
    $region4: #{crf_forward.1} parent=1 // pred_region
      _
    $region5: #{crf_forward.1} parent=1 // pred_fallthru
      _
    // Predicated region
    $region6: #{crf_forward.1} parent=1 // pred_check
      _
    $region7: #{crf_forward.1} parent=1 // pred_check_branch
      %24 = sbr.rel (0) target = $region9
    $region8: #{crf_forward.1} parent=1 // pred_region
      _
    $region9: #{crf_forward.1} parent=1 // pred_fallthru
      _
    // Predicated region
    $region10: #{crf_forward.1} parent=1 // pred_check
      _
    $region11: #{crf_forward.1} parent=1 // pred_check_branch
      %26 = sbr.rel (0) target = $region13
    $region12: #{crf_forward.1} parent=1 // pred_region
      _
    $region13: #{crf_forward.1} parent=1 // pred_fallthru
      _
    // Predicated region
    $region14: #{crf_forward.1} parent=1 // pred_check
      _
    $region15: #{crf_forward.1} parent=1 // pred_check_branch
      %28 = sbr.rel (0) target = $region17
    $region16: #{crf_forward.1} parent=1 // pred_region
      _
    $region17: #{crf_forward.1} parent=1 // pred_fallthru
      _
    // Predicated region
    $region18: #{crf_forward.1} parent=1 // pred_check
      _
    $region19: #{crf_forward.1} parent=1 // pred_check_branch
      %30 = sbr.rel (0) target = $region21
    $region20: #{crf_forward.1} parent=1 // pred_region
      _
    $region21: #{crf_forward.1} parent=1 // pred_fallthru
      _
    // Predicated region
    $region22: #{crf_forward.1} parent=1 // pred_check
      _
    $region23: #{crf_forward.1} parent=1 // pred_check_branch
      %32 = sbr.rel (0) target = $region25
    $region24: #{crf_forward.1} parent=1 // pred_region
      %34 = vsyncadd [#allocation4], 0
      %s36 = sshll.u32 %s5, 4
      %s37 = int_to_ptr.vmem [resolvable:$true] %s36
      %39 = dma.vmem_to_smem %s37, 16, [#allocation2], [#allocation4]
    $region25: #{crf_forward.1} parent=1 // pred_fallthru
      _
    // Predicated region
    $region26: #{crf_forward.1} parent=1 // pred_check
      _
    $region27: #{crf_forward.1} parent=1 // pred_check_branch
      %41 = sbr.rel (0) target = $region29
    $region28: #{crf_forward.1} parent=1 // pred_region
      %43 = vsyncadd [#allocation6], 0
      %s45 = sshll.u32 %s6, 4
      %s46 = int_to_ptr.vmem [resolvable:$true] %s45
      %48 = dma.vmem_to_smem %s46, 16, [#allocation5], [#allocation6]
    $region29: #{crf_forward.1} parent=1 // pred_fallthru
      _
    // Predicated region
    $region30: #{crf_forward.1} parent=1 // pred_check
      _
    $region31: #{crf_forward.1} parent=1 // pred_check_branch
      %50 = sbr.rel (0) target = $region33
    $region32: #{crf_forward.1} parent=1 // pred_region
      %52 = vsyncadd [#allocation6], 0
      %s54 = sshll.u32 %s7, 4
      %s55 = int_to_ptr.vmem [resolvable:$true] %s54
      %57 = dma.vmem_to_smem %s55, 16, [#allocation7], [#allocation6]
    $region33: #{crf_forward.1} parent=1 // pred_fallthru
      _
    // Predicated region
    $region34: #{crf_forward.1} parent=1 // pred_check
      _
    $region35: #{crf_forward.1} parent=1 // pred_check_branch
      %59 = sbr.rel (0) target = $region37
    $region36: #{crf_forward.1} parent=1 // pred_region
      %61 = vsyncadd [#allocation9], 0
      %s63 = sshll.u32 %s8, 4
      %s64 = int_to_ptr.vmem [resolvable:$true] %s63
      %66 = dma.vmem_to_smem %s64, 16, [#allocation8], [#allocation9]
    $region37: #{crf_forward.1} parent=1 // pred_fallthru
      _
    // Predicated region
    $region38: #{crf_forward.1} parent=1 // pred_check
      _
    $region39: #{crf_forward.1} parent=1 // pred_check_branch
      %68 = sbr.rel (0) target = $region41
    $region40: #{crf_forward.1} parent=1 // pred_region
      %70 = vsyncadd [#allocation9], 0
      %s72 = sshll.u32 %s9, 4
      %s73 = int_to_ptr.vmem [resolvable:$true] %s72
      %75 = dma.vmem_to_smem %s73, 16, [#allocation10], [#allocation9]
    $region41: #{crf_forward.1} parent=1 // pred_fallthru
      _
    // Predicated region
    $region42: #{crf_forward.1} parent=1 // pred_check
      _
    $region43: #{crf_forward.1} parent=1 // pred_check_branch
      %77 = sbr.rel (0) target = $region45
    $region44: #{crf_forward.1} parent=1 // pred_region
      %79 = vsyncadd [#allocation12], 0
      %s81 = sshll.u32 %s10, 4
      %s82 = int_to_ptr.vmem [resolvable:$true] %s81
      %84 = dma.vmem_to_smem %s82, 32, [#allocation11], [#allocation12]
    $region45: #{crf_forward.1} parent=1 // pred_fallthru
      _
    // Predicated region
    $region46: #{crf_forward.1} parent=1 // pred_check
      _
    $region47: #{crf_forward.1} parent=1 // pred_check_branch
      %86 = sbr.rel (0) target = $region49
    $region48: #{crf_forward.1} parent=1 // pred_region
      %88 = dma.done [#allocation4], 16
    $region49: #{crf_forward.1} parent=1 // pred_fallthru
      _
    // Predicated region
    $region50: #{crf_forward.1} parent=1 // pred_check
      _
    $region51: #{crf_forward.1} parent=1 // pred_check_branch
      %90 = sbr.rel (0) target = $region53
    $region52: #{crf_forward.1} parent=1 // pred_region
      %92 = dma.done [#allocation6], 16
    $region53: #{crf_forward.1} parent=1 // pred_fallthru
      _
    // Predicated region
    $region54: #{crf_forward.1} parent=1 // pred_check
      _
    $region55: #{crf_forward.1} parent=1 // pred_check_branch
      %94 = sbr.rel (0) target = $region57
    $region56: #{crf_forward.1} parent=1 // pred_region
      %96 = dma.done [#allocation6], 16
    $region57: #{crf_forward.1} parent=1 // pred_fallthru
      _
    // Predicated region
    $region58: #{crf_forward.1} parent=1 // pred_check
      _
    $region59: #{crf_forward.1} parent=1 // pred_check_branch
      %98 = sbr.rel (0) target = $region61
    $region60: #{crf_forward.1} parent=1 // pred_region
      %100 = dma.done [#allocation9], 16
    $region61: #{crf_forward.1} parent=1 // pred_fallthru
      _
    // Predicated region
    $region62: #{crf_forward.1} parent=1 // pred_check
      _
    $region63: #{crf_forward.1} parent=1 // pred_check_branch
      %102 = sbr.rel (0) target = $region65
    $region64: #{crf_forward.1} parent=1 // pred_region
      %104 = dma.done [#allocation9], 16
    $region65: #{crf_forward.1} parent=1 // pred_fallthru
      _
    // Predicated region
    $region66: #{crf_forward.1} parent=1 // pred_check
      _
    $region67: #{crf_forward.1} parent=1 // pred_check_branch
      %106 = sbr.rel (0) target = $region69
    $region68: #{crf_forward.1} parent=1 // pred_region
      %108 = dma.done [#allocation12], 32
    $region69: #{crf_forward.1} parent=1 // pred_fallthru
      _
    %109 = sfence
    %s110 = sld [smem:[#allocation2]]
    %s111 = sld [smem:[#allocation8 + %s110]]
    %s112 = sld [smem:[#allocation7]]
    %s113 = sadd.f32 %s111, %s112
    %s114 = sld [smem:[#allocation5 + $0x1]]
    %s115 = sld [smem:[#allocation2 + $0x1]]
    %s116 = smul.u32 %s110, 16
    %s117 = sadd.s32 %s116, %s115
    %s118 = sld [smem:[#allocation11 + %s117]]
    %s119 = sld [smem:[#allocation7 + $0x1]]
    %s120 = sadd.f32 %s118, %s119
    %p121 = scmp.gt.s32.totalorder %s114, 0
    %s122 = scalar_select %p121, %s120, 0.0
    %s123 = sadd.f32 %s113, %s122
    %s124 = sadd.s32 %s114, 1
    %s125 = sld [smem:[#allocation5 + $0x2]]
    %s126 = sld [smem:[#allocation2 + $0x2]]
    %s127 = smul.u32 %s115, 16
    %s128 = sadd.s32 %s127, %s126
    %s129 = sld [smem:[#allocation11 + %s128]]
    %s130 = sld [smem:[#allocation7 + $0x2]]
    %s131 = sadd.f32 %s129, %s130
    %p132 = scmp.gt.s32.totalorder %s125, 0
    %s133 = scalar_select %p132, %s131, 0.0
    %s134 = sadd.f32 %s123, %s133
    %s135 = sadd.s32 %s124, %s125
    %s136 = sld [smem:[#allocation5 + $0x3]]
    %s137 = sld [smem:[#allocation2 + $0x3]]
    %s138 = smul.u32 %s126, 16
    %s139 = sadd.s32 %s138, %s137
    %s140 = sld [smem:[#allocation11 + %s139]]
    %s141 = sld [smem:[#allocation7 + $0x3]]
    %s142 = sadd.f32 %s140, %s141
    %p143 = scmp.gt.s32.totalorder %s136, 0
    %s144 = scalar_select %p143, %s142, 0.0
    %s145 = sadd.f32 %s134, %s144
    %s146 = sadd.s32 %s135, %s136
    %s147 = sld [smem:[#allocation5 + $0x4]]
    %s148 = sld [smem:[#allocation2 + $0x4]]
    %s149 = smul.u32 %s137, 16
    %s150 = sadd.s32 %s149, %s148
    %s151 = sld [smem:[#allocation11 + %s150]]
    %s152 = sld [smem:[#allocation7 + $0x4]]
    %s153 = sadd.f32 %s151, %s152
    %p154 = scmp.gt.s32.totalorder %s147, 0
    %s155 = scalar_select %p154, %s153, 0.0
    %s156 = sadd.f32 %s145, %s155
    %s157 = sadd.s32 %s146, %s147
    %s158 = sld [smem:[#allocation5 + $0x5]]
    %s159 = sld [smem:[#allocation2 + $0x5]]
    %s160 = smul.u32 %s148, 16
    %s161 = sadd.s32 %s160, %s159
    %s162 = sld [smem:[#allocation11 + %s161]]
    %s163 = sld [smem:[#allocation7 + $0x5]]
    %s164 = sadd.f32 %s162, %s163
    %p165 = scmp.gt.s32.totalorder %s158, 0
    %s166 = scalar_select %p165, %s164, 0.0
    %s167 = sadd.f32 %s156, %s166
    %s168 = sadd.s32 %s157, %s158
    %s169 = sld [smem:[#allocation5 + $0x6]]
    %s170 = sld [smem:[#allocation2 + $0x6]]
    %s171 = smul.u32 %s159, 16
    %s172 = sadd.s32 %s171, %s170
    %s173 = sld [smem:[#allocation11 + %s172]]
    %s174 = sld [smem:[#allocation7 + $0x6]]
    %s175 = sadd.f32 %s173, %s174
    %p176 = scmp.gt.s32.totalorder %s169, 0
    %s177 = scalar_select %p176, %s175, 0.0
    %s178 = sadd.f32 %s167, %s177
    %s179 = sadd.s32 %s168, %s169
    %s180 = sld [smem:[#allocation5 + $0x7]]
    %s181 = sld [smem:[#allocation2 + $0x7]]
    %s182 = smul.u32 %s170, 16
    %s183 = sadd.s32 %s182, %s181
    %s184 = sld [smem:[#allocation11 + %s183]]
    %s185 = sld [smem:[#allocation7 + $0x7]]
    %s186 = sadd.f32 %s184, %s185
    %p187 = scmp.gt.s32.totalorder %s180, 0
    %s188 = scalar_select %p187, %s186, 0.0
    %s189 = sadd.f32 %s178, %s188
    %s190 = sadd.s32 %s179, %s180
    %s191 = ssub.s32 %s190, 1
    %s192 = sld [smem:[#allocation2 + %s191]]
    %s193 = sld [smem:[#allocation10 + %s192]]
    %s194 = sadd.f32 %s189, %s193
    %s195 = sadd.f32 %s194, 0.0
    %s196 = sld [smem:[#allocation2 + $0x8]]
    %s197 = sld [smem:[#allocation8 + %s196]]
    %s198 = sld [smem:[#allocation7 + $0x8]]
    %s199 = sadd.f32 %s197, %s198
    %s200 = sld [smem:[#allocation5 + $0x9]]
    %s201 = sld [smem:[#allocation2 + $0x9]]
    %s202 = smul.u32 %s196, 16
    %s203 = sadd.s32 %s202, %s201
    %s204 = sld [smem:[#allocation11 + %s203]]
    %s205 = sld [smem:[#allocation7 + $0x9]]
    %s206 = sadd.f32 %s204, %s205
    %p207 = scmp.gt.s32.totalorder %s200, 0
    %s208 = scalar_select %p207, %s206, 0.0
    %s209 = sadd.f32 %s199, %s208
    %s210 = sadd.s32 %s200, 1
    %s211 = sld [smem:[#allocation5 + $0xa]]
    %s212 = sld [smem:[#allocation2 + $0xa]]
    %s213 = smul.u32 %s201, 16
    %s214 = sadd.s32 %s213, %s212
    %s215 = sld [smem:[#allocation11 + %s214]]
    %s216 = sld [smem:[#allocation7 + $0xa]]
    %s217 = sadd.f32 %s215, %s216
    %p218 = scmp.gt.s32.totalorder %s211, 0
    %s219 = scalar_select %p218, %s217, 0.0
    %s220 = sadd.f32 %s209, %s219
    %s221 = sadd.s32 %s210, %s211
    %s222 = sld [smem:[#allocation5 + $0xb]]
    %s223 = sld [smem:[#allocation2 + $0xb]]
    %s224 = smul.u32 %s212, 16
    %s225 = sadd.s32 %s224, %s223
    %s226 = sld [smem:[#allocation11 + %s225]]
    %s227 = sld [smem:[#allocation7 + $0xb]]
    %s228 = sadd.f32 %s226, %s227
    %p229 = scmp.gt.s32.totalorder %s222, 0
    %s230 = scalar_select %p229, %s228, 0.0
    %s231 = sadd.f32 %s220, %s230
    %s232 = sadd.s32 %s221, %s222
    %s233 = sld [smem:[#allocation5 + $0xc]]
    %s234 = sld [smem:[#allocation2 + $0xc]]
    %s235 = smul.u32 %s223, 16
    %s236 = sadd.s32 %s235, %s234
    %s237 = sld [smem:[#allocation11 + %s236]]
    %s238 = sld [smem:[#allocation7 + $0xc]]
    %s239 = sadd.f32 %s237, %s238
    %p240 = scmp.gt.s32.totalorder %s233, 0
    %s241 = scalar_select %p240, %s239, 0.0
    %s242 = sadd.f32 %s231, %s241
    %s243 = sadd.s32 %s232, %s233
    %s244 = sld [smem:[#allocation5 + $0xd]]
    %s245 = sld [smem:[#allocation2 + $0xd]]
    %s246 = smul.u32 %s234, 16
    %s247 = sadd.s32 %s246, %s245
    %s248 = sld [smem:[#allocation11 + %s247]]
    %s249 = sld [smem:[#allocation7 + $0xd]]
    %s250 = sadd.f32 %s248, %s249
    %p251 = scmp.gt.s32.totalorder %s244, 0
    %s252 = scalar_select %p251, %s250, 0.0
    %s253 = sadd.f32 %s242, %s252
    %s254 = sadd.s32 %s243, %s244
    %s255 = sld [smem:[#allocation5 + $0xe]]
    %s256 = sld [smem:[#allocation2 + $0xe]]
    %s257 = smul.u32 %s245, 16
    %s258 = sadd.s32 %s257, %s256
    %s259 = sld [smem:[#allocation11 + %s258]]
    %s260 = sld [smem:[#allocation7 + $0xe]]
    %s261 = sadd.f32 %s259, %s260
    %p262 = scmp.gt.s32.totalorder %s255, 0
    %s263 = scalar_select %p262, %s261, 0.0
    %s264 = sadd.f32 %s253, %s263
    %s265 = sadd.s32 %s254, %s255
    %s266 = sld [smem:[#allocation5 + $0xf]]
    %s267 = sld [smem:[#allocation2 + $0xf]]
    %s268 = smul.u32 %s256, 16
    %s269 = sadd.s32 %s268, %s267
    %s270 = sld [smem:[#allocation11 + %s269]]
    %s271 = sld [smem:[#allocation7 + $0xf]]
    %s272 = sadd.f32 %s270, %s271
    %p273 = scmp.gt.s32.totalorder %s266, 0
    %s274 = scalar_select %p273, %s272, 0.0
    %s275 = sadd.f32 %s264, %s274
    %s276 = sadd.s32 %s265, %s266
    %s277 = sadd.s32 %s276, 7
    %s278 = sld [smem:[#allocation2 + %s277]]
    %s279 = sld [smem:[#allocation10 + %s278]]
    %s280 = sadd.f32 %s275, %s279
    %s281 = sadd.f32 %s195, %s280
    %s282 = sadd.s32 %s190, %s276
    %s283 = sld [smem:[#allocation2 + $0x10]]
    %s284 = sld [smem:[#allocation8 + %s283]]
    %s285 = sld [smem:[#allocation7 + $0x10]]
    %s286 = sadd.f32 %s284, %s285
    %s287 = sld [smem:[#allocation5 + $0x11]]
    %s288 = sld [smem:[#allocation2 + $0x11]]
    %s289 = smul.u32 %s283, 16
    %s290 = sadd.s32 %s289, %s288
    %s291 = sld [smem:[#allocation11 + %s290]]
    %s292 = sld [smem:[#allocation7 + $0x11]]
    %s293 = sadd.f32 %s291, %s292
    %p294 = scmp.gt.s32.totalorder %s287, 0
    %s295 = scalar_select %p294, %s293, 0.0
    %s296 = sadd.f32 %s286, %s295
    %s297 = sadd.s32 %s287, 1
    %s298 = sld [smem:[#allocation5 + $0x12]]
    %s299 = sld [smem:[#allocation2 + $0x12]]
    %s300 = smul.u32 %s288, 16
    %s301 = sadd.s32 %s300, %s299
    %s302 = sld [smem:[#allocation11 + %s301]]
    %s303 = sld [smem:[#allocation7 + $0x12]]
    %s304 = sadd.f32 %s302, %s303
    %p305 = scmp.gt.s32.totalorder %s298, 0
    %s306 = scalar_select %p305, %s304, 0.0
    %s307 = sadd.f32 %s296, %s306
    %s308 = sadd.s32 %s297, %s298
    %s309 = sld [smem:[#allocation5 + $0x13]]
    %s310 = sld [smem:[#allocation2 + $0x13]]
    %s311 = smul.u32 %s299, 16
    %s312 = sadd.s32 %s311, %s310
    %s313 = sld [smem:[#allocation11 + %s312]]
    %s314 = sld [smem:[#allocation7 + $0x13]]
    %s315 = sadd.f32 %s313, %s314
    %p316 = scmp.gt.s32.totalorder %s309, 0
    %s317 = scalar_select %p316, %s315, 0.0
    %s318 = sadd.f32 %s307, %s317
    %s319 = sadd.s32 %s308, %s309
    %s320 = sld [smem:[#allocation5 + $0x14]]
    %s321 = sld [smem:[#allocation2 + $0x14]]
    %s322 = smul.u32 %s310, 16
    %s323 = sadd.s32 %s322, %s321
    %s324 = sld [smem:[#allocation11 + %s323]]
    %s325 = sld [smem:[#allocation7 + $0x14]]
    %s326 = sadd.f32 %s324, %s325
    %p327 = scmp.gt.s32.totalorder %s320, 0
    %s328 = scalar_select %p327, %s326, 0.0
    %s329 = sadd.f32 %s318, %s328
    %s330 = sadd.s32 %s319, %s320
    %s331 = sld [smem:[#allocation5 + $0x15]]
    %s332 = sld [smem:[#allocation2 + $0x15]]
    %s333 = smul.u32 %s321, 16
    %s334 = sadd.s32 %s333, %s332
    %s335 = sld [smem:[#allocation11 + %s334]]
    %s336 = sld [smem:[#allocation7 + $0x15]]
    %s337 = sadd.f32 %s335, %s336
    %p338 = scmp.gt.s32.totalorder %s331, 0
    %s339 = scalar_select %p338, %s337, 0.0
    %s340 = sadd.f32 %s329, %s339
    %s341 = sadd.s32 %s330, %s331
    %s342 = sld [smem:[#allocation5 + $0x16]]
    %s343 = sld [smem:[#allocation2 + $0x16]]
    %s344 = smul.u32 %s332, 16
    %s345 = sadd.s32 %s344, %s343
    %s346 = sld [smem:[#allocation11 + %s345]]
    %s347 = sld [smem:[#allocation7 + $0x16]]
    %s348 = sadd.f32 %s346, %s347
    %p349 = scmp.gt.s32.totalorder %s342, 0
    %s350 = scalar_select %p349, %s348, 0.0
    %s351 = sadd.f32 %s340, %s350
    %s352 = sadd.s32 %s341, %s342
    %s353 = sld [smem:[#allocation5 + $0x17]]
    %s354 = sld [smem:[#allocation2 + $0x17]]
    %s355 = smul.u32 %s343, 16
    %s356 = sadd.s32 %s355, %s354
    %s357 = sld [smem:[#allocation11 + %s356]]
    %s358 = sld [smem:[#allocation7 + $0x17]]
    %s359 = sadd.f32 %s357, %s358
    %p360 = scmp.gt.s32.totalorder %s353, 0
    %s361 = scalar_select %p360, %s359, 0.0
    %s362 = sadd.f32 %s351, %s361
    %s363 = sadd.s32 %s352, %s353
    %s364 = sadd.s32 %s363, 15
    %s365 = sld [smem:[#allocation2 + %s364]]
    %s366 = sld [smem:[#allocation10 + %s365]]
    %s367 = sadd.f32 %s362, %s366
    %s368 = sadd.f32 %s281, %s367
    %s369 = sadd.s32 %s282, %s363
    %s370 = sld [smem:[#allocation2 + $0x18]]
    %s371 = sld [smem:[#allocation8 + %s370]]
    %s372 = sld [smem:[#allocation7 + $0x18]]
    %s373 = sadd.f32 %s371, %s372
    %s374 = sld [smem:[#allocation5 + $0x19]]
    %s375 = sld [smem:[#allocation2 + $0x19]]
    %s376 = smul.u32 %s370, 16
    %s377 = sadd.s32 %s376, %s375
    %s378 = sld [smem:[#allocation11 + %s377]]
    %s379 = sld [smem:[#allocation7 + $0x19]]
    %s380 = sadd.f32 %s378, %s379
    %p381 = scmp.gt.s32.totalorder %s374, 0
    %s382 = scalar_select %p381, %s380, 0.0
    %s383 = sadd.f32 %s373, %s382
    %s384 = sadd.s32 %s374, 1
    %s385 = sld [smem:[#allocation5 + $0x1a]]
    %s386 = sld [smem:[#allocation2 + $0x1a]]
    %s387 = smul.u32 %s375, 16
    %s388 = sadd.s32 %s387, %s386
    %s389 = sld [smem:[#allocation11 + %s388]]
    %s390 = sld [smem:[#allocation7 + $0x1a]]
    %s391 = sadd.f32 %s389, %s390
    %p392 = scmp.gt.s32.totalorder %s385, 0
    %s393 = scalar_select %p392, %s391, 0.0
    %s394 = sadd.f32 %s383, %s393
    %s395 = sadd.s32 %s384, %s385
    %s396 = sld [smem:[#allocation5 + $0x1b]]
    %s397 = sld [smem:[#allocation2 + $0x1b]]
    %s398 = smul.u32 %s386, 16
    %s399 = sadd.s32 %s398, %s397
    %s400 = sld [smem:[#allocation11 + %s399]]
    %s401 = sld [smem:[#allocation7 + $0x1b]]
    %s402 = sadd.f32 %s400, %s401
    %p403 = scmp.gt.s32.totalorder %s396, 0
    %s404 = scalar_select %p403, %s402, 0.0
    %s405 = sadd.f32 %s394, %s404
    %s406 = sadd.s32 %s395, %s396
    %s407 = sld [smem:[#allocation5 + $0x1c]]
    %s408 = sld [smem:[#allocation2 + $0x1c]]
    %s409 = smul.u32 %s397, 16
    %s410 = sadd.s32 %s409, %s408
    %s411 = sld [smem:[#allocation11 + %s410]]
    %s412 = sld [smem:[#allocation7 + $0x1c]]
    %s413 = sadd.f32 %s411, %s412
    %p414 = scmp.gt.s32.totalorder %s407, 0
    %s415 = scalar_select %p414, %s413, 0.0
    %s416 = sadd.f32 %s405, %s415
    %s417 = sadd.s32 %s406, %s407
    %s418 = sld [smem:[#allocation5 + $0x1d]]
    %s419 = sld [smem:[#allocation2 + $0x1d]]
    %s420 = smul.u32 %s408, 16
    %s421 = sadd.s32 %s420, %s419
    %s422 = sld [smem:[#allocation11 + %s421]]
    %s423 = sld [smem:[#allocation7 + $0x1d]]
    %s424 = sadd.f32 %s422, %s423
    %p425 = scmp.gt.s32.totalorder %s418, 0
    %s426 = scalar_select %p425, %s424, 0.0
    %s427 = sadd.f32 %s416, %s426
    %s428 = sadd.s32 %s417, %s418
    %s429 = sld [smem:[#allocation5 + $0x1e]]
    %s430 = sld [smem:[#allocation2 + $0x1e]]
    %s431 = smul.u32 %s419, 16
    %s432 = sadd.s32 %s431, %s430
    %s433 = sld [smem:[#allocation11 + %s432]]
    %s434 = sld [smem:[#allocation7 + $0x1e]]
    %s435 = sadd.f32 %s433, %s434
    %p436 = scmp.gt.s32.totalorder %s429, 0
    %s437 = scalar_select %p436, %s435, 0.0
    %s438 = sadd.f32 %s427, %s437
    %s439 = sadd.s32 %s428, %s429
    %s440 = sld [smem:[#allocation5 + $0x1f]]
    %s441 = sld [smem:[#allocation2 + $0x1f]]
    %s442 = smul.u32 %s430, 16
    %s443 = sadd.s32 %s442, %s441
    %s444 = sld [smem:[#allocation11 + %s443]]
    %s445 = sld [smem:[#allocation7 + $0x1f]]
    %s446 = sadd.f32 %s444, %s445
    %p447 = scmp.gt.s32.totalorder %s440, 0
    %s448 = scalar_select %p447, %s446, 0.0
    %s449 = sadd.f32 %s438, %s448
    %s450 = sadd.s32 %s439, %s440
    %s451 = sadd.s32 %s450, 23
    %s452 = sld [smem:[#allocation2 + %s451]]
    %s453 = sld [smem:[#allocation10 + %s452]]
    %s454 = sadd.f32 %s449, %s453
    %s455 = sadd.f32 %s368, %s454
    %s456 = sadd.s32 %s369, %s450
    %s457 = scvt.s32.f32 %s456
    %v458 = vld [vmem:[%s4] sm:$0xff]
    %v459 = vld [vmem:[%s4 + $0x8] sm:$0xff]
    %vm460 = vcmask 130048
    %v461 = vsel %vm460, %v458, -inf
    %v462 = vsel %vm460, %v459, -inf
    %v463 = vmax.f32 %v461, %v462
    %v464 = vrot.slane %v463, 4
    %v465 = vmax.f32 %v463, %v464
    %v466 = vrot.slane %v465, 2
    %v467 = vmax.f32 %v465, %v466
    %v468 = vrot.slane %v467, 1
    %v469 = vmax.f32 %v467, %v468
    %v470 = vsub.f32 %v458, %v469
    %v471 = vsub.f32 %v459, %v469
    %v472 = vmul.f32 %v470, 1.442695
    %v473 = vpow.pop %v472
    %v474 = vmul.f32 %v471, 1.442695
    %v475 = vpow.pop %v474
    %v476 = vld [vmem:[%s2] sm:$0x1]
    %v477 = vld [vmem:[%s0] sm:$0x1]
    %v478 = vld [vmem:[%s0 + $0x8] sm:$0x1]
    %v479 = vld [vmem:[%s0 + $0x10] sm:$0x1]
    %v480 = vld [vmem:[%s0 + $0x18] sm:$0x1]
    %v482 = vperm.slane %v476, 0
    %v488 = vrot.slane %v478, 7
    %vm489 = vcmask 1041409
    %v490 = vsel %vm489, %v488, %v477
    %v491 = vrot.slane %v479, 6
    %vm492 = vcmask 1042434
    %v493 = vsel %vm492, %v491, %v490
    %v494 = vrot.slane %v480, 5
    %vm495 = vcmask 1043459
    %v496 = vsel %vm495, %v494, %v493
    %v498 = vadd.f32 %v482, %v496
    %v499 = vld [vmem:[%s0 + $0x1] sm:$0x1]
    %v500 = vld [vmem:[%s0 + $0x9] sm:$0x1]
    %v501 = vld [vmem:[%s0 + $0x11] sm:$0x1]
    %v502 = vld [vmem:[%s0 + $0x19] sm:$0x1]
    %v503 = vld [vmem:[%s1] sm:$0xf]
    %vm504 = vcmask 125952
    %v505 = vsel %vm504, %v498, -inf
    %506 = vmax.xlane.f32.xlu0 %v505
    %v507 = vpop.xlane.xlu0 %506
    %v508 = vsub.f32 %v498, %v507
    %v509 = vmul.f32 %v508, 1.442695
    %v510 = vpow.pop %v509
    %v512 = vsel %vm460, %v510, 0
    %514 = vmatpush.msra.mxu0 0.0
    %515 = vmatpush.msra.mxu0 0.0
    %516 = vmatpush.msra.mxu0 0.0
    %517 = vmatpush.msra.mxu0 0.0
    %518 = vmatpush.msra.mxu0 0.0
    %519 = vmatpush.msra.mxu0 0.0
    %520 = vmatpush.msra.mxu0 0.0
    %521 = vmatpush.msra.mxu0 0.0
    %522 = vmatpush.msra.mxu0 0.0
    %523 = vmatpush.msra.mxu0 0.0
    %524 = vmatpush.msra.mxu0 0.0
    %525 = vmatpush.msra.mxu0 0.0
    %526 = vmatpush.msra.mxu0 0.0
    %527 = vmatpush.msra.mxu0 0.0
    %528 = vmatpush.msra.mxu0 %v475
    %529 = vmatpush.msra.mxu0 %v473
    %530 = vmatmul.f32.gmra.mxu0 %v512
    %v531 = vpop.f32.mrf.mxu0
    %v532 = vadd.f32 0.0, %v531
    %533 = vdwg.mxu0
    %v534 = vmax.f32 %v532, 1e-30
    %v536 = vrot.slane %v507, 1
    %v537 = vrot.slane %v507, 2
    %v538 = vrot.slane %v507, 3
    %v543 = vadd.f32 %v499, %v507
    %v544 = vadd.f32 %v500, %v536
    %v545 = vadd.f32 %v501, %v537
    %v546 = vadd.f32 %v502, %v538
    %v547 = vadd.f32 %v543, %v469
    %v548 = vadd.f32 %v544, %v469
    %v549 = vadd.f32 %v545, %v469
    %v550 = vadd.f32 %v546, %v469
    %v551 = vlog2.pop %v534
    %v552 = vmul.f32 %v551, 0.6931472
    %v554 = vrot.slane %v552, 1
    %v555 = vrot.slane %v552, 2
    %v556 = vrot.slane %v552, 3
    %v561 = vadd.f32 %v547, %v552
    %v562 = vadd.f32 %v548, %v554
    %v563 = vadd.f32 %v549, %v555
    %v564 = vadd.f32 %v550, %v556
    %vm565 = vcmp.gt.f32.partialorder %v503, 0.0
    %v566 = vsel %vm565, 1, 0
    %567 = vset.pattern.permute.xlu0 1
    %568 = vperm.xlu0 %567, %v566
    %v569 = vpop.permute.xlu0 %568
    %vm570 = vcmp.eq.s32.totalorder %v569, 1
    %v575 = vrot.slane %v562, 7
    %v576 = vsel %vm489, %v575, %v561
    %v577 = vrot.slane %v563, 6
    %v578 = vsel %vm492, %v577, %v576
    %v579 = vrot.slane %v564, 5
    %v580 = vsel %vm495, %v579, %v578
    %v582 = vsel %vm570, %v580, %v498
    %v583 = vld [vmem:[%s0 + $0x2] sm:$0x1]
    %v584 = vld [vmem:[%s0 + $0xa] sm:$0x1]
    %v585 = vld [vmem:[%s0 + $0x12] sm:$0x1]
    %v586 = vld [vmem:[%s0 + $0x1a] sm:$0x1]
    %v587 = vsel %vm504, %v582, -inf
    %588 = vmax.xlane.f32.xlu0 %v587
    %v589 = vpop.xlane.xlu0 %588
    %v590 = vsub.f32 %v582, %v589
    %v591 = vmul.f32 %v590, 1.442695
    %v592 = vpow.pop %v591
    %v594 = vsel %vm460, %v592, 0
    %596 = vmatpush.msra.mxu0 0.0
    %597 = vmatpush.msra.mxu0 0.0
    %598 = vmatpush.msra.mxu0 0.0
    %599 = vmatpush.msra.mxu0 0.0
    %600 = vmatpush.msra.mxu0 0.0
    %601 = vmatpush.msra.mxu0 0.0
    %602 = vmatpush.msra.mxu0 0.0
    %603 = vmatpush.msra.mxu0 0.0
    %604 = vmatpush.msra.mxu0 0.0
    %605 = vmatpush.msra.mxu0 0.0
    %606 = vmatpush.msra.mxu0 0.0
    %607 = vmatpush.msra.mxu0 0.0
    %608 = vmatpush.msra.mxu0 0.0
    %609 = vmatpush.msra.mxu0 0.0
    %610 = vmatpush.msra.mxu0 %v475
    %611 = vmatpush.msra.mxu0 %v473
    %612 = vmatmul.f32.gmra.mxu0 %v594
    %v613 = vpop.f32.mrf.mxu0
    %v614 = vadd.f32 0.0, %v613
    %615 = vdwg.mxu0
    %v616 = vmax.f32 %v614, 1e-30
    %v618 = vrot.slane %v589, 1
    %v619 = vrot.slane %v589, 2
    %v620 = vrot.slane %v589, 3
    %v625 = vadd.f32 %v583, %v589
    %v626 = vadd.f32 %v584, %v618
    %v627 = vadd.f32 %v585, %v619
    %v628 = vadd.f32 %v586, %v620
    %v629 = vadd.f32 %v625, %v469
    %v630 = vadd.f32 %v626, %v469
    %v631 = vadd.f32 %v627, %v469
    %v632 = vadd.f32 %v628, %v469
    %v633 = vlog2.pop %v616
    %v634 = vmul.f32 %v633, 0.6931472
    %v636 = vrot.slane %v634, 1
    %v637 = vrot.slane %v634, 2
    %v638 = vrot.slane %v634, 3
    %v643 = vadd.f32 %v629, %v634
    %v644 = vadd.f32 %v630, %v636
    %v645 = vadd.f32 %v631, %v637
    %v646 = vadd.f32 %v632, %v638
    %647 = vset.pattern.permute.xlu0 2
    %648 = vperm.xlu0 %647, %v566
    %v649 = vpop.permute.xlu0 %648
    %vm650 = vcmp.eq.s32.totalorder %v649, 1
    %v655 = vrot.slane %v644, 7
    %v656 = vsel %vm489, %v655, %v643
    %v657 = vrot.slane %v645, 6
    %v658 = vsel %vm492, %v657, %v656
    %v659 = vrot.slane %v646, 5
    %v660 = vsel %vm495, %v659, %v658
    %v662 = vsel %vm650, %v660, %v582
    %v663 = vld [vmem:[%s0 + $0x3] sm:$0x1]
    %v664 = vld [vmem:[%s0 + $0xb] sm:$0x1]
    %v665 = vld [vmem:[%s0 + $0x13] sm:$0x1]
    %v666 = vld [vmem:[%s0 + $0x1b] sm:$0x1]
    %v667 = vsel %vm504, %v662, -inf
    %668 = vmax.xlane.f32.xlu0 %v667
    %v669 = vpop.xlane.xlu0 %668
    %v670 = vsub.f32 %v662, %v669
    %v671 = vmul.f32 %v670, 1.442695
    %v672 = vpow.pop %v671
    %v674 = vsel %vm460, %v672, 0
    %676 = vmatpush.msra.mxu0 0.0
    %677 = vmatpush.msra.mxu0 0.0
    %678 = vmatpush.msra.mxu0 0.0
    %679 = vmatpush.msra.mxu0 0.0
    %680 = vmatpush.msra.mxu0 0.0
    %681 = vmatpush.msra.mxu0 0.0
    %682 = vmatpush.msra.mxu0 0.0
    %683 = vmatpush.msra.mxu0 0.0
    %684 = vmatpush.msra.mxu0 0.0
    %685 = vmatpush.msra.mxu0 0.0
    %686 = vmatpush.msra.mxu0 0.0
    %687 = vmatpush.msra.mxu0 0.0
    %688 = vmatpush.msra.mxu0 0.0
    %689 = vmatpush.msra.mxu0 0.0
    %690 = vmatpush.msra.mxu0 %v475
    %691 = vmatpush.msra.mxu0 %v473
    %692 = vmatmul.f32.gmra.mxu0 %v674
    %v693 = vpop.f32.mrf.mxu0
    %v694 = vadd.f32 0.0, %v693
    %695 = vdwg.mxu0
    %v696 = vmax.f32 %v694, 1e-30
    %v698 = vrot.slane %v669, 1
    %v699 = vrot.slane %v669, 2
    %v700 = vrot.slane %v669, 3
    %v705 = vadd.f32 %v663, %v669
    %v706 = vadd.f32 %v664, %v698
    %v707 = vadd.f32 %v665, %v699
    %v708 = vadd.f32 %v666, %v700
    %v709 = vadd.f32 %v705, %v469
    %v710 = vadd.f32 %v706, %v469
    %v711 = vadd.f32 %v707, %v469
    %v712 = vadd.f32 %v708, %v469
    %v713 = vlog2.pop %v696
    %v714 = vmul.f32 %v713, 0.6931472
    %v716 = vrot.slane %v714, 1
    %v717 = vrot.slane %v714, 2
    %v718 = vrot.slane %v714, 3
    %v723 = vadd.f32 %v709, %v714
    %v724 = vadd.f32 %v710, %v716
    %v725 = vadd.f32 %v711, %v717
    %v726 = vadd.f32 %v712, %v718
    %727 = vset.pattern.permute.xlu0 3
    %728 = vperm.xlu0 %727, %v566
    %v729 = vpop.permute.xlu0 %728
    %vm730 = vcmp.eq.s32.totalorder %v729, 1
    %v735 = vrot.slane %v724, 7
    %v736 = vsel %vm489, %v735, %v723
    %v737 = vrot.slane %v725, 6
    %v738 = vsel %vm492, %v737, %v736
    %v739 = vrot.slane %v726, 5
    %v740 = vsel %vm495, %v739, %v738
    %v742 = vsel %vm730, %v740, %v662
    %v743 = vld [vmem:[%s0 + $0x4] sm:$0x1]
    %v744 = vld [vmem:[%s0 + $0xc] sm:$0x1]
    %v745 = vld [vmem:[%s0 + $0x14] sm:$0x1]
    %v746 = vld [vmem:[%s0 + $0x1c] sm:$0x1]
    %v747 = vsel %vm504, %v742, -inf
    %748 = vmax.xlane.f32.xlu0 %v747
    %v749 = vpop.xlane.xlu0 %748
    %v750 = vsub.f32 %v742, %v749
    %v751 = vmul.f32 %v750, 1.442695
    %v752 = vpow.pop %v751
    %v754 = vsel %vm460, %v752, 0
    %756 = vmatpush.msra.mxu0 0.0
    %757 = vmatpush.msra.mxu0 0.0
    %758 = vmatpush.msra.mxu0 0.0
    %759 = vmatpush.msra.mxu0 0.0
    %760 = vmatpush.msra.mxu0 0.0
    %761 = vmatpush.msra.mxu0 0.0
    %762 = vmatpush.msra.mxu0 0.0
    %763 = vmatpush.msra.mxu0 0.0
    %764 = vmatpush.msra.mxu0 0.0
    %765 = vmatpush.msra.mxu0 0.0
    %766 = vmatpush.msra.mxu0 0.0
    %767 = vmatpush.msra.mxu0 0.0
    %768 = vmatpush.msra.mxu0 0.0
    %769 = vmatpush.msra.mxu0 0.0
    %770 = vmatpush.msra.mxu0 %v475
    %771 = vmatpush.msra.mxu0 %v473
    %772 = vmatmul.f32.gmra.mxu0 %v754
    %v773 = vpop.f32.mrf.mxu0
    %v774 = vadd.f32 0.0, %v773
    %775 = vdwg.mxu0
    %v776 = vmax.f32 %v774, 1e-30
    %v778 = vrot.slane %v749, 1
    %v779 = vrot.slane %v749, 2
    %v780 = vrot.slane %v749, 3
    %v785 = vadd.f32 %v743, %v749
    %v786 = vadd.f32 %v744, %v778
    %v787 = vadd.f32 %v745, %v779
    %v788 = vadd.f32 %v746, %v780
    %v789 = vadd.f32 %v785, %v469
    %v790 = vadd.f32 %v786, %v469
    %v791 = vadd.f32 %v787, %v469
    %v792 = vadd.f32 %v788, %v469
    %v793 = vlog2.pop %v776
    %v794 = vmul.f32 %v793, 0.6931472
    %v796 = vrot.slane %v794, 1
    %v797 = vrot.slane %v794, 2
    %v798 = vrot.slane %v794, 3
    %v803 = vadd.f32 %v789, %v794
    %v804 = vadd.f32 %v790, %v796
    %v805 = vadd.f32 %v791, %v797
    %v806 = vadd.f32 %v792, %v798
    %807 = vset.pattern.permute.xlu0 4
    %808 = vperm.xlu0 %807, %v566
    %v809 = vpop.permute.xlu0 %808
    %vm810 = vcmp.eq.s32.totalorder %v809, 1
    %v815 = vrot.slane %v804, 7
    %v816 = vsel %vm489, %v815, %v803
    %v817 = vrot.slane %v805, 6
    %v818 = vsel %vm492, %v817, %v816
    %v819 = vrot.slane %v806, 5
    %v820 = vsel %vm495, %v819, %v818
    %v822 = vsel %vm810, %v820, %v742
    %v823 = vld [vmem:[%s0 + $0x5] sm:$0x1]
    %v824 = vld [vmem:[%s0 + $0xd] sm:$0x1]
    %v825 = vld [vmem:[%s0 + $0x15] sm:$0x1]
    %v826 = vld [vmem:[%s0 + $0x1d] sm:$0x1]
    %v827 = vsel %vm504, %v822, -inf
    %828 = vmax.xlane.f32.xlu0 %v827
    %v829 = vpop.xlane.xlu0 %828
    %v830 = vsub.f32 %v822, %v829
    %v831 = vmul.f32 %v830, 1.442695
    %v832 = vpow.pop %v831
    %v834 = vsel %vm460, %v832, 0
    %836 = vmatpush.msra.mxu0 0.0
    %837 = vmatpush.msra.mxu0 0.0
    %838 = vmatpush.msra.mxu0 0.0
    %839 = vmatpush.msra.mxu0 0.0
    %840 = vmatpush.msra.mxu0 0.0
    %841 = vmatpush.msra.mxu0 0.0
    %842 = vmatpush.msra.mxu0 0.0
    %843 = vmatpush.msra.mxu0 0.0
    %844 = vmatpush.msra.mxu0 0.0
    %845 = vmatpush.msra.mxu0 0.0
    %846 = vmatpush.msra.mxu0 0.0
    %847 = vmatpush.msra.mxu0 0.0
    %848 = vmatpush.msra.mxu0 0.0
    %849 = vmatpush.msra.mxu0 0.0
    %850 = vmatpush.msra.mxu0 %v475
    %851 = vmatpush.msra.mxu0 %v473
    %852 = vmatmul.f32.gmra.mxu0 %v834
    %v853 = vpop.f32.mrf.mxu0
    %v854 = vadd.f32 0.0, %v853
    %855 = vdwg.mxu0
    %v856 = vmax.f32 %v854, 1e-30
    %v858 = vrot.slane %v829, 1
    %v859 = vrot.slane %v829, 2
    %v860 = vrot.slane %v829, 3
    %v865 = vadd.f32 %v823, %v829
    %v866 = vadd.f32 %v824, %v858
    %v867 = vadd.f32 %v825, %v859
    %v868 = vadd.f32 %v826, %v860
    %v869 = vadd.f32 %v865, %v469
    %v870 = vadd.f32 %v866, %v469
    %v871 = vadd.f32 %v867, %v469
    %v872 = vadd.f32 %v868, %v469
    %v873 = vlog2.pop %v856
    %v874 = vmul.f32 %v873, 0.6931472
    %v876 = vrot.slane %v874, 1
    %v877 = vrot.slane %v874, 2
    %v878 = vrot.slane %v874, 3
    %v883 = vadd.f32 %v869, %v874
    %v884 = vadd.f32 %v870, %v876
    %v885 = vadd.f32 %v871, %v877
    %v886 = vadd.f32 %v872, %v878
    %887 = vset.pattern.permute.xlu0 5
    %888 = vperm.xlu0 %887, %v566
    %v889 = vpop.permute.xlu0 %888
    %vm890 = vcmp.eq.s32.totalorder %v889, 1
    %v895 = vrot.slane %v884, 7
    %v896 = vsel %vm489, %v895, %v883
    %v897 = vrot.slane %v885, 6
    %v898 = vsel %vm492, %v897, %v896
    %v899 = vrot.slane %v886, 5
    %v900 = vsel %vm495, %v899, %v898
    %v902 = vsel %vm890, %v900, %v822
    %v903 = vld [vmem:[%s0 + $0x6] sm:$0x1]
    %v904 = vld [vmem:[%s0 + $0xe] sm:$0x1]
    %v905 = vld [vmem:[%s0 + $0x16] sm:$0x1]
    %v906 = vld [vmem:[%s0 + $0x1e] sm:$0x1]
    %v907 = vsel %vm504, %v902, -inf
    %908 = vmax.xlane.f32.xlu0 %v907
    %v909 = vpop.xlane.xlu0 %908
    %v910 = vsub.f32 %v902, %v909
    %v911 = vmul.f32 %v910, 1.442695
    %v912 = vpow.pop %v911
    %v914 = vsel %vm460, %v912, 0
    %916 = vmatpush.msra.mxu0 0.0
    %917 = vmatpush.msra.mxu0 0.0
    %918 = vmatpush.msra.mxu0 0.0
    %919 = vmatpush.msra.mxu0 0.0
    %920 = vmatpush.msra.mxu0 0.0
    %921 = vmatpush.msra.mxu0 0.0
    %922 = vmatpush.msra.mxu0 0.0
    %923 = vmatpush.msra.mxu0 0.0
    %924 = vmatpush.msra.mxu0 0.0
    %925 = vmatpush.msra.mxu0 0.0
    %926 = vmatpush.msra.mxu0 0.0
    %927 = vmatpush.msra.mxu0 0.0
    %928 = vmatpush.msra.mxu0 0.0
    %929 = vmatpush.msra.mxu0 0.0
    %930 = vmatpush.msra.mxu0 %v475
    %931 = vmatpush.msra.mxu0 %v473
    %932 = vmatmul.f32.gmra.mxu0 %v914
    %v933 = vpop.f32.mrf.mxu0
    %v934 = vadd.f32 0.0, %v933
    %935 = vdwg.mxu0
    %v936 = vmax.f32 %v934, 1e-30
    %v938 = vrot.slane %v909, 1
    %v939 = vrot.slane %v909, 2
    %v940 = vrot.slane %v909, 3
    %v945 = vadd.f32 %v903, %v909
    %v946 = vadd.f32 %v904, %v938
    %v947 = vadd.f32 %v905, %v939
    %v948 = vadd.f32 %v906, %v940
    %v949 = vadd.f32 %v945, %v469
    %v950 = vadd.f32 %v946, %v469
    %v951 = vadd.f32 %v947, %v469
    %v952 = vadd.f32 %v948, %v469
    %v953 = vlog2.pop %v936
    %v954 = vmul.f32 %v953, 0.6931472
    %v956 = vrot.slane %v954, 1
    %v957 = vrot.slane %v954, 2
    %v958 = vrot.slane %v954, 3
    %v963 = vadd.f32 %v949, %v954
    %v964 = vadd.f32 %v950, %v956
    %v965 = vadd.f32 %v951, %v957
    %v966 = vadd.f32 %v952, %v958
    %967 = vset.pattern.permute.xlu0 6
    %968 = vperm.xlu0 %967, %v566
    %v969 = vpop.permute.xlu0 %968
    %vm970 = vcmp.eq.s32.totalorder %v969, 1
    %v975 = vrot.slane %v964, 7
    %v976 = vsel %vm489, %v975, %v963
    %v977 = vrot.slane %v965, 6
    %v978 = vsel %vm492, %v977, %v976
    %v979 = vrot.slane %v966, 5
    %v980 = vsel %vm495, %v979, %v978
    %v982 = vsel %vm970, %v980, %v902
    %v983 = vld [vmem:[%s0 + $0x7] sm:$0x1]
    %v984 = vld [vmem:[%s0 + $0xf] sm:$0x1]
    %v985 = vld [vmem:[%s0 + $0x17] sm:$0x1]
    %v986 = vld [vmem:[%s0 + $0x1f] sm:$0x1]
    %v987 = vsel %vm504, %v982, -inf
    %988 = vmax.xlane.f32.xlu0 %v987
    %v989 = vpop.xlane.xlu0 %988
    %v990 = vsub.f32 %v982, %v989
    %v991 = vmul.f32 %v990, 1.442695
    %v992 = vpow.pop %v991
    %v994 = vsel %vm460, %v992, 0
    %996 = vmatpush.msra.mxu0 0.0
    %997 = vmatpush.msra.mxu0 0.0
    %998 = vmatpush.msra.mxu0 0.0
    %999 = vmatpush.msra.mxu0 0.0
    %1000 = vmatpush.msra.mxu0 0.0
    %1001 = vmatpush.msra.mxu0 0.0
    %1002 = vmatpush.msra.mxu0 0.0
    %1003 = vmatpush.msra.mxu0 0.0
    %1004 = vmatpush.msra.mxu0 0.0
    %1005 = vmatpush.msra.mxu0 0.0
    %1006 = vmatpush.msra.mxu0 0.0
    %1007 = vmatpush.msra.mxu0 0.0
    %1008 = vmatpush.msra.mxu0 0.0
    %1009 = vmatpush.msra.mxu0 0.0
    %1010 = vmatpush.msra.mxu0 %v475
    %1011 = vmatpush.msra.mxu0 %v473
    %1012 = vmatmul.f32.gmra.mxu0 %v994
    %v1013 = vpop.f32.mrf.mxu0
    %v1014 = vadd.f32 0.0, %v1013
    %1015 = vdwg.mxu0
    %v1016 = vmax.f32 %v1014, 1e-30
    %v1018 = vrot.slane %v989, 1
    %v1019 = vrot.slane %v989, 2
    %v1020 = vrot.slane %v989, 3
    %v1025 = vadd.f32 %v983, %v989
    %v1026 = vadd.f32 %v984, %v1018
    %v1027 = vadd.f32 %v985, %v1019
    %v1028 = vadd.f32 %v986, %v1020
    %v1029 = vadd.f32 %v1025, %v469
    %v1030 = vadd.f32 %v1026, %v469
    %v1031 = vadd.f32 %v1027, %v469
    %v1032 = vadd.f32 %v1028, %v469
    %v1033 = vlog2.pop %v1016
    %v1034 = vmul.f32 %v1033, 0.6931472
    %v1036 = vrot.slane %v1034, 1
    %v1037 = vrot.slane %v1034, 2
    %v1038 = vrot.slane %v1034, 3
    %v1043 = vadd.f32 %v1029, %v1034
    %v1044 = vadd.f32 %v1030, %v1036
    %v1045 = vadd.f32 %v1031, %v1037
    %v1046 = vadd.f32 %v1032, %v1038
    %1047 = vset.pattern.permute.xlu0 7
    %1048 = vperm.xlu0 %1047, %v566
    %v1049 = vpop.permute.xlu0 %1048
    %vm1050 = vcmp.eq.s32.totalorder %v1049, 1
    %v1055 = vrot.slane %v1044, 7
    %v1056 = vsel %vm489, %v1055, %v1043
    %v1057 = vrot.slane %v1045, 6
    %v1058 = vsel %vm492, %v1057, %v1056
    %v1059 = vrot.slane %v1046, 5
    %v1060 = vsel %vm495, %v1059, %v1058
    %v1062 = vsel %vm1050, %v1060, %v982
    %v1063 = vld [vmem:[%s3] sm:$0x1]
    %v1065 = vperm.slane %v1063, 0
    %v1067 = vadd.f32 %v1062, %v1065
    %v1068 = vsel %vm504, %v1067, -inf
    %1069 = vmax.xlane.f32.xlu0 %v1068
    %v1070 = vpop.xlane.xlu0 %1069
    %v1071 = vsub.f32 %v1067, %v1070
    %v1072 = vmul.f32 %v1071, 1.442695
    %v1073 = vpow.pop %v1072
    %v1074 = vsel %vm504, %v1073, 0.0
    %1075 = vadd.xlane.f32.xlu0 %v1074
    %v1076 = vpop.xlane.xlu0 %1075
    %v1077 = vlog2.pop %v1076
    %v1078 = vmul.f32 %v1077, 0.6931472
    %v1079 = vadd.f32 %v1070, %v1078
    %vm1080 = vcmask 1043456
    %v1081 = vsel %vm1080, %v1079, 0.0
    %v1082 = vrot.slane %v1081, 4
    %v1083 = vadd.f32 %v1081, %v1082
    %v1084 = vrot.slane %v1083, 2
    %v1085 = vadd.f32 %v1083, %v1084
    %v1086 = vrot.slane %v1085, 1
    %v1087 = vadd.f32 %v1085, %v1086
    %v1088 = vstv %s455
    %v1089 = vsub.f32 %v1088, %v1087
    %v1090 = vstv %s457
    %v1091 = vrcp.pop %v1090
    %v1092 = vmul.f32 %v1090, %v1091
    %v1093 = vsub.f32 1.0, %v1092
    %v1094 = vmul.f32 %v1091, %v1093
    %v1095 = vadd.f32 %v1091, %v1094
    %vm1096 = vweird.f32 %v1090
    %vm1097 = vweird.f32 %v1091
    %vm1098 = vmor %vm1096, %vm1097
    %v1099 = vsel %vm1098, %v1091, %v1095
    %v1100 = vand.u32 2147483647, %v1090
    %vm1101 = vcmp.eq.f32.partialorder %v1100, 8.507059e+37
    %v1102 = vand.u32 %v1090, 2147483648
    %v1103 = vor.u32 1.1754944e-38, %v1102
    %v1104 = vsel %vm1101, %v1103, %v1099
    %v1105 = vmul.f32 %v1089, %v1104
    %vm1106 = vcmask 0
    %1107 = vst.msk [vmem:[#allocation13] sm:$0x1] %vm1106, %v1105
    // Predicated region
    $region70: #{crf_forward.1} parent=1 // pred_check
      _
    $region71: #{crf_forward.1} parent=1 // pred_check_branch
      %1109 = sbr.rel (0) target = $region73
    $region72: #{crf_forward.1} parent=1 // pred_region
      %1111 = vsyncadd [#allocation3], 0
      %s1113 = sshll.u32 [#allocation13], 4
      %s1114 = int_to_ptr.vmem [resolvable:$true] %s1113
      %s1115 = sshll.u32 %s11, 4
      %s1116 = int_to_ptr.hbm [resolvable:$true] %s1115
      %1118 = dma.vmem_to_hbm [thread:$0]  %s1114, 16, %s1116, [#allocation3]
    $region73: #{crf_forward.1} parent=1 // pred_fallthru
      _
    // Predicated region
    $region74: #{crf_forward.1} parent=1 // pred_check
      _
    $region75: #{crf_forward.1} parent=1 // pred_check_branch
      %1120 = sbr.rel (0) target = $region77
    $region76: #{crf_forward.1} parent=1 // pred_region
      %1122 = dma.done [#allocation3], 16
    $region77: #{crf_forward.1} parent=1 // pred_fallthru
      _
    %1123 = vsyncpa [#allocation3], 1
    %1124 = vsyncpa [#allocation4], 1
    %1125 = vsyncpa [#allocation6], 1
    %1126 = vsyncpa [#allocation9], 1
    %1127 = vsyncpa [#allocation12], 1

</llo_original>
